<compile_context>
chip_gen: v7x
topology: tpu7x:2x2x1
jax: 0.10.0
libtpu: 0.0.40
codegen_flags: <defaults>
</compile_context>

<pallas_src>
import numpy as np
import jax
import jax.numpy as jnp
from jax.experimental import pallas as pl
from jax.experimental.pallas import tpu as pltpu

HP = 128       # per-gate padded hidden width == TPU lane width
TILE_N = 128   # MLP row tile (multiple of 8 sublanes, lane-dense output width)


def _round_up(x, m):
    return (x + m - 1) // m * m


# ----------------------------- fused GRU kernel ------------------------------
def _gru_kernel(x_ref, len_ref, wih_ref, whh_ref, bih_ref, bhh_ref, out_ref):
    """One encoder per grid step.

    x_ref:   (T*Bp, E)   time-major rows (row = t*Bp + b), f32
    len_ref: (Bp, 1)     int32 valid lengths (0 for padded batch rows)
    wih_ref: (E,  3*HP)  gate blocks [r|z|n], each 128-lane aligned, zero padded
    whh_ref: (HP, 3*HP)  idem (rows >= real H are zero)
    bih/bhh: (1,  3*HP)
    out_ref: (Bp, HP)    hidden at last valid timestep (lanes >= real H stay 0)
    """
    TB, _ = x_ref.shape
    Bp, H = out_ref.shape          # H here is the padded width HP (=128)
    T = TB // Bp

    wih = wih_ref[...]
    whh = whh_ref[...]
    bih = bih_ref[...]
    bhh = bhh_ref[...]
    lens = len_ref[...]            # (Bp, 1) int32

    # Hoisted input projection: one (T*Bp, E) @ (E, 3*HP) MXU matmul instead of
    # T tiny matmuls inside the serial recurrence.
    gi_all = jnp.dot(x_ref[...], wih, preferred_element_type=jnp.float32) + bih

    h = jnp.zeros((Bp, H), jnp.float32)
    # Fully unrolled recurrence (T is a small static trace-time constant); only the
    # hidden matmul remains on the serial critical path. Gate slices are at 128-lane
    # boundaries -> full-vreg, unmasked ops.
    for t in range(T):
        gi = gi_all[t * Bp:(t + 1) * Bp]        # static, sublane-aligned slice
        gh = jnp.dot(h, whh, preferred_element_type=jnp.float32) + bhh
        r = jax.nn.sigmoid(gi[:, 0:H] + gh[:, 0:H])
        z = jax.nn.sigmoid(gi[:, H:2 * H] + gh[:, H:2 * H])
        n = jnp.tanh(gi[:, 2 * H:3 * H] + r * gh[:, 2 * H:3 * H])
        h_new = (1.0 - z) * n + z * h
        # Freeze hidden past each sequence end (emulates pack_padded_sequence +
        # last-hidden gather). Zero-length (padded) rows simply stay 0.
        h = jnp.where(t < lens, h_new, h)
    out_ref[...] = h


def gru_encoders(x, lens, wih, whh, bih, bhh):
    """x: (4, T*Bp, E); lens: (4, Bp, 1); stacked padded weights. -> (4, Bp, HP)."""
    G, TB, E = x.shape
    Bp = lens.shape[1]
    H3 = wih.shape[-1]
    Hp = H3 // 3
    return pl.pallas_call(
        _gru_kernel,
        out_shape=jax.ShapeDtypeStruct((G, Bp, Hp), jnp.float32),
        grid=(G,),
        in_specs=[
            pl.BlockSpec((None, TB, E), lambda g: (g, 0, 0)),
            pl.BlockSpec((None, Bp, 1), lambda g: (g, 0, 0)),
            pl.BlockSpec((None, E, H3), lambda g: (g, 0, 0)),
            pl.BlockSpec((None, Hp, H3), lambda g: (g, 0, 0)),
            pl.BlockSpec((None, 1, H3), lambda g: (g, 0, 0)),
            pl.BlockSpec((None, 1, H3), lambda g: (g, 0, 0)),
        ],
        out_specs=pl.BlockSpec((None, Bp, Hp), lambda g: (g, 0, 0)),
        compiler_params=pltpu.CompilerParams(
            dimension_semantics=("parallel",)),  # encoders shard across TCs on v7x
    )(x, lens, wih, whh, bih, bhh)


# ----------------------------- MLP head kernel -------------------------------
def _mlp_kernel(x_ref, w1_ref, b1_ref, w2_ref, b2_ref, w3_ref, out_ref):
    # x_ref: (TILE_N, 4H) lane-dense concat(state_rep, act_out); 4H==128 at H=32,
    # so each layer is a single aligned MXU pass (weights are zero-padded to 128
    # output lanes, relu(0)=0 keeps padded lanes inert).
    z = jnp.dot(x_ref[...], w1_ref[...], preferred_element_type=jnp.float32) + b1_ref[...]
    z = jnp.maximum(z, 0.0)
    z = jnp.dot(z, w2_ref[...], preferred_element_type=jnp.float32) + b2_ref[...]
    z = jnp.maximum(z, 0.0)
    # Final (H -> 1) layer as VPU multiply + lane reduce; scores stored as a
    # lane-dense (1, TILE_N) row instead of a lane-width-1 (TILE_N, 1) column.
    out_ref[...] = jnp.sum(z * w3_ref[...], axis=-1)[None, :]


def mlp_head(z_in, w1p, b1p, w2p, b2p, w3p):
    Np, K = z_in.shape
    grid_n = Np // TILE_N
    return pl.pallas_call(
        _mlp_kernel,
        out_shape=jax.ShapeDtypeStruct((1, Np), jnp.float32),
        grid=(grid_n,),
        in_specs=[
            pl.BlockSpec((TILE_N, K), lambda i: (i, 0)),
            pl.BlockSpec((K, HP), lambda i: (0, 0)),
            pl.BlockSpec((1, HP), lambda i: (0, 0)),
            pl.BlockSpec((HP, HP), lambda i: (0, 0)),
            pl.BlockSpec((1, HP), lambda i: (0, 0)),
            pl.BlockSpec((1, HP), lambda i: (0, 0)),
        ],
        out_specs=pl.BlockSpec((1, TILE_N), lambda i: (0, i)),
        compiler_params=pltpu.CompilerParams(
            dimension_semantics=("parallel",)),
    )(z_in, w1p, b1p, w2p, b2p, w3p)


# ----------------------------- parameter init --------------------------------
def init_params(key, vocab_size, E, H):
    ks = jax.random.split(key, 8)

    def unif(k, shape, bound):
        return jax.random.uniform(k, shape, jnp.float32, -bound, bound)

    def gru_params(k):
        k1, k2, k3, k4 = jax.random.split(k, 4)
        b = 1.0 / np.sqrt(H)
        # PyTorch nn.GRU default: weights AND biases ~ U(-1/sqrt(H), 1/sqrt(H)).
        # Stored transposed so gi = x @ wih; gate order [r|z|n].
        return dict(wih=unif(k1, (E, 3 * H), b), whh=unif(k2, (H, 3 * H), b),
                    bih=unif(k3, (1, 3 * H), b), bhh=unif(k4, (1, 3 * H), b))

    return dict(
        embedding=jax.random.normal(ks[0], (vocab_size, E), jnp.float32),
        obs=gru_params(ks[1]), look=gru_params(ks[2]),
        inv=gru_params(ks[3]), act=gru_params(ks[4]),
        # weight_init: kaiming_uniform_ (bound sqrt(6/fan_in)), bias = 0
        w1=unif(ks[5], (4 * H, H), np.sqrt(6.0 / (4 * H))),
        b1=jnp.zeros((1, H), jnp.float32),
        w2=unif(ks[6], (H, H), np.sqrt(6.0 / H)),
        b2=jnp.zeros((1, H), jnp.float32),
        w3=unif(ks[7], (H, 1), np.sqrt(6.0 / H)),
        b3=jnp.zeros((1, 1), jnp.float32),
    )


def _pad_gru(wih, whh, bih, bhh, H):
    """Lay each gate into its own 128-lane block (zero padded)."""
    E = wih.shape[0]
    wih_p = jnp.zeros((E, 3 * HP), jnp.float32)
    whh_p = jnp.zeros((HP, 3 * HP), jnp.float32)
    bih_p = jnp.zeros((1, 3 * HP), jnp.float32)
    bhh_p = jnp.zeros((1, 3 * HP), jnp.float32)
    for g in range(3):
        src = slice(g * H, (g + 1) * H)
        dst = slice(g * HP, g * HP + H)
        wih_p = wih_p.at[:, dst].set(wih[:, src])
        whh_p = whh_p.at[:H, dst].set(whh[:, src])
        bih_p = bih_p.at[:, dst].set(bih[:, src])
        bhh_p = bhh_p.at[:, dst].set(bhh[:, src])
    return wih_p, whh_p, bih_p, bhh_p


def pack_params(params):
    """Stack the 4 encoders' padded GRU weights and pad MLP weights to 128 lanes."""
    H = params["w2"].shape[0]
    assert H <= HP, "hidden_dim must be <= 128 for this padded-lane layout"
    stacks = ([], [], [], [])
    for name in ("obs", "look", "inv", "act"):
        p = params[name]
        for lst, arr in zip(stacks, _pad_gru(p["wih"], p["whh"], p["bih"], p["bhh"], H)):
            lst.append(arr)
    gru = tuple(jnp.stack(lst, axis=0) for lst in stacks)

    K = params["w1"].shape[0]   # 4H  (== 128 lanes exactly when H == 32)
    w1p = jnp.zeros((K, HP), jnp.float32).at[:, :H].set(params["w1"])
    b1p = jnp.zeros((1, HP), jnp.float32).at[:, :H].set(params["b1"])
    w2p = jnp.zeros((HP, HP), jnp.float32).at[:H, :H].set(params["w2"])
    b2p = jnp.zeros((1, HP), jnp.float32).at[:, :H].set(params["b2"])
    w3p = jnp.zeros((1, HP), jnp.float32).at[:, :H].set(params["w3"][:, 0][None, :])
    return dict(gru=gru, mlp=(w1p, b1p, w2p, b2p, w3p), H=H)


# ----------------------------- forward ---------------------------------------
def forward(params, packed, obs_tok, obs_len, look_tok, look_len,
            inv_tok, inv_len, act_tok, act_len, act_sizes):
    emb = params["embedding"]
    E = emb.shape[1]
    H = packed["H"]

    toks = (obs_tok, look_tok, inv_tok, act_tok)
    lens = (obs_len, look_len, inv_len, act_len)
    B = obs_tok.shape[0]
    N = act_tok.shape[0]
    Bp = _round_up(max(B, N), 8)                  # common padded batch for all 4 GRUs
    Tm = max(t.shape[1] for t in toks)

    x_list, len_list = [], []
    for tok, ln in zip(toks, lens):
        b, t = tok.shape
        tok_p = jnp.zeros((Bp, Tm), jnp.int32).at[:b, :t].set(tok.astype(jnp.int32))
        ln_p = jnp.zeros((Bp,), jnp.int32).at[:b].set(ln.astype(jnp.int32))
        e = jnp.take(emb, tok_p, axis=0)                                # (Bp, Tm, E)
        x_list.append(jnp.transpose(e, (1, 0, 2)).reshape(Tm * Bp, E))  # time-major rows
        len_list.append(ln_p.reshape(Bp, 1))
    x_stacked = jnp.stack(x_list, axis=0)          # (4, Tm*Bp, E)
    len_stacked = jnp.stack(len_list, axis=0)      # (4, Bp, 1)

    hidden = gru_encoders(x_stacked, len_stacked, *packed["gru"])       # (4, Bp, HP)
    obs_h, look_h, inv_h = hidden[0, :B, :H], hidden[1, :B, :H], hidden[2, :B, :H]
    act_h = hidden[3, :N, :H]

    state_out = jnp.concatenate([obs_h, look_h, inv_h], axis=1)         # (B, 3H)
    rep_idx = np.repeat(np.arange(B), np.asarray(act_sizes))            # static glue
    z_in = jnp.concatenate([state_out[rep_idx], act_h], axis=1)         # (N, 4H)

    Np = _round_up(N, TILE_N)
    z_pad = jnp.zeros((Np, 4 * H), jnp.float32).at[:N].set(z_in)
    scores_row = mlp_head(z_pad, *packed["mlp"])                        # (1, Np)
    scores = scores_row[0, :N] + params["b3"][0, 0]                     # fold b3 here
    splits = np.cumsum(np.asarray(act_sizes))[:-1].tolist()
    return jnp.split(scores, splits)


# ----------------------------- pure-JAX reference -----------------------------
def forward_reference(params, obs_tok, obs_len, look_tok, look_len,
                      inv_tok, inv_len, act_tok, act_len, act_sizes):
    emb = params["embedding"]
    H = params["w2"].shape[0]

    def gru(tok, ln, p):
        x = jnp.take(emb, tok.astype(jnp.int32), axis=0)   # (B, T, E)
        x = jnp.transpose(x, (1, 0, 2))                    # (T, B, E)
        T, B, _ = x.shape
        h = jnp.zeros((B, H), jnp.float32)
        for t in range(T):
            gi = x[t] @ p["wih"] + p["bih"]
            gh = h @ p["whh"] + p["bhh"]
            r = jax.nn.sigmoid(gi[:, :H] + gh[:, :H])
            z = jax.nn.sigmoid(gi[:, H:2 * H] + gh[:, H:2 * H])
            n = jnp.tanh(gi[:, 2 * H:] + r * gh[:, 2 * H:])
            h = jnp.where((t < ln)[:, None], (1.0 - z) * n + z * h, h)
        return h

    act_h = gru(act_tok, act_len, params["act"])
    obs_h = gru(obs_tok, obs_len, params["obs"])
    look_h = gru(look_tok, look_len, params["look"])
    inv_h = gru(inv_tok, inv_len, params["inv"])
    state_out = jnp.concatenate([obs_h, look_h, inv_h], axis=1)
    rep_idx = np.repeat(np.arange(obs_tok.shape[0]), np.asarray(act_sizes))
    z = jnp.concatenate([state_out[rep_idx], act_h], axis=1)
    z = jnp.maximum(z @ params["w1"] + params["b1"], 0.0)
    z = jnp.maximum(z @ params["w2"] + params["b2"], 0.0)
    scores = (z @ params["w3"] + params["b3"])[:, 0]
    splits = np.cumsum(np.asarray(act_sizes))[:-1].tolist()
    return jnp.split(scores, splits)


# ----------------------------- demo / main ------------------------------------
def make_padded(key, n_seq, T, lengths, vocab_size):
    toks = jax.random.randint(key, (n_seq, T), 1, vocab_size, dtype=jnp.int32)
    mask = jnp.arange(T)[None, :] < jnp.asarray(lengths)[:, None]
    return jnp.where(mask, toks, 0), jnp.asarray(lengths, dtype=jnp.int32)


if __name__ == "__main__":
    vocab_size, E, H = 50, 32, 32
    B, T = 2, 8
    act_sizes = [3, 2]           # state 0 has 3 candidate actions, state 1 has 2
    N = sum(act_sizes)

    key = jax.random.PRNGKey(0)
    kp, k1, k2, k3, k4 = jax.random.split(key, 5)
    params = init_params(kp, vocab_size, E, H)
    packed = pack_params(params)

    # NOTE: zero-length sequences return h=0 (PyTorch's pack_padded_sequence would reject them).
    obs_tok, obs_len = make_padded(k1, B, T, [5, 8], vocab_size)
    look_tok, look_len = make_padded(k2, B, T, [3, 6], vocab_size)
    inv_tok, inv_len = make_padded(k3, B, T, [4, 2], vocab_size)
    act_tok, act_len = make_padded(k4, N, T, [2, 5, 3, 8, 4], vocab_size)

    act_values = forward(params, packed, obs_tok, obs_len, look_tok, look_len,
                         inv_tok, inv_len, act_tok, act_len, act_sizes)
    act_values = [jax.block_until_ready(v) for v in act_values]

    assert len(act_values) == len(act_sizes)
    assert all(v.shape == (s,) for v, s in zip(act_values, act_sizes))

    # Pure-JAX reference check (same math, no Pallas / no padding tricks).
    ref_values = forward_reference(params, obs_tok, obs_len, look_tok, look_len,
                                   inv_tok, inv_len, act_tok, act_len, act_sizes)
    for v, r in zip(act_values, ref_values):
        np.testing.assert_allclose(np.asarray(v), np.asarray(r), rtol=2e-3, atol=2e-3)

    print("KERNEL_OK")
</pallas_src>

<mosaic_0001>
module attributes {stable_mosaic.version = 11 : i64} {
  func.func @_gru_kernel(%arg0: i32, %arg1: memref<1x64x32xf32, #tpu.memory_space<vmem>>, %arg2: memref<1x8x1xi32, #tpu.memory_space<vmem>>, %arg3: memref<1x32x384xf32, #tpu.memory_space<vmem>>, %arg4: memref<1x128x384xf32, #tpu.memory_space<vmem>>, %arg5: memref<1x1x384xf32, #tpu.memory_space<vmem>>, %arg6: memref<1x1x384xf32, #tpu.memory_space<vmem>>, %arg7: memref<1x8x128xf32, #tpu.memory_space<vmem>>) attributes {dimension_semantics = [#tpu.dimension_semantics<parallel>], iteration_bounds = array<i64: 4>, scalar_prefetch = 0 : i64, scratch_operands = 0 : i64, tpu.core_type = #tpu.core_type<tc>, window_params = [{transform_indices = @transform_0, window_bounds = array<i64: 1, 64, 32>}, {transform_indices = @transform_1, window_bounds = array<i64: 1, 8, 1>}, {transform_indices = @transform_2, window_bounds = array<i64: 1, 32, 384>}, {transform_indices = @transform_3, window_bounds = array<i64: 1, 128, 384>}, {transform_indices = @transform_4, window_bounds = array<i64: 1, 1, 384>}, {transform_indices = @transform_5, window_bounds = array<i64: 1, 1, 384>}, {transform_indices = @transform_6, window_bounds = array<i64: 1, 8, 128>}]} {
    %c0 = arith.constant 0 : index
    %c0_0 = arith.constant 0 : index
    %c0_1 = arith.constant 0 : index
    %0 = vector.load %arg3[%c0, %c0_0, %c0_1] : memref<1x32x384xf32, #tpu.memory_space<vmem>>, vector<1x32x384xf32>
    %1 = vector.shape_cast %0 : vector<1x32x384xf32> to vector<32x384xf32>
    %c0_2 = arith.constant 0 : index
    %c0_3 = arith.constant 0 : index
    %c0_4 = arith.constant 0 : index
    %2 = vector.load %arg4[%c0_2, %c0_3, %c0_4] : memref<1x128x384xf32, #tpu.memory_space<vmem>>, vector<1x128x384xf32>
    %3 = vector.shape_cast %2 : vector<1x128x384xf32> to vector<128x384xf32>
    %c0_5 = arith.constant 0 : index
    %c0_6 = arith.constant 0 : index
    %c0_7 = arith.constant 0 : index
    %4 = vector.load %arg5[%c0_5, %c0_6, %c0_7] : memref<1x1x384xf32, #tpu.memory_space<vmem>>, vector<1x1x384xf32>
    %5 = vector.shape_cast %4 : vector<1x1x384xf32> to vector<1x384xf32>
    %c0_8 = arith.constant 0 : index
    %c0_9 = arith.constant 0 : index
    %c0_10 = arith.constant 0 : index
    %6 = vector.load %arg6[%c0_8, %c0_9, %c0_10] : memref<1x1x384xf32, #tpu.memory_space<vmem>>, vector<1x1x384xf32>
    %7 = vector.shape_cast %6 : vector<1x1x384xf32> to vector<1x384xf32>
    %c0_11 = arith.constant 0 : index
    %c0_12 = arith.constant 0 : index
    %c0_13 = arith.constant 0 : index
    %8 = vector.load %arg2[%c0_11, %c0_12, %c0_13] : memref<1x8x1xi32, #tpu.memory_space<vmem>>, vector<1x8x1xi32>
    %9 = vector.shape_cast %8 : vector<1x8x1xi32> to vector<8x1xi32>
    %c0_14 = arith.constant 0 : index
    %c0_15 = arith.constant 0 : index
    %c0_16 = arith.constant 0 : index
    %10 = vector.load %arg1[%c0_14, %c0_15, %c0_16] : memref<1x64x32xf32, #tpu.memory_space<vmem>>, vector<1x64x32xf32>
    %11 = vector.shape_cast %10 : vector<1x64x32xf32> to vector<64x32xf32>
    %cst = arith.constant dense<0.000000e+00> : vector<64x384xf32>
    %12 = tpu.matmul %11, %1, %cst {dimension_numbers = #tpu.dot_dimension_numbers<[1], [0], [0], [1], [0, 0, 1, 1], [], []>} : vector<64x32xf32>, vector<32x384xf32>, vector<64x384xf32> -> vector<64x384xf32>
    %13 = vector.broadcast %5 : vector<1x384xf32> to vector<64x384xf32>
    %14 = arith.addf %12, %13 : vector<64x384xf32>
    %cst_17 = arith.constant 0.000000e+00 : f32
    %15 = vector.broadcast %cst_17 : f32 to vector<8x128xf32>
    %16 = vector.extract_strided_slice %14 {offsets = [0, 0], sizes = [8, 384], strides = [1, 1]} : vector<64x384xf32> to vector<8x384xf32>
    %cst_18 = arith.constant dense<0.000000e+00> : vector<8x384xf32>
    %17 = tpu.matmul %15, %3, %cst_18 {dimension_numbers = #tpu.dot_dimension_numbers<[1], [0], [0], [1], [0, 0, 1, 1], [], []>} : vector<8x128xf32>, vector<128x384xf32>, vector<8x384xf32> -> vector<8x384xf32>
    %18 = vector.broadcast %7 : vector<1x384xf32> to vector<8x384xf32>
    %19 = arith.addf %17, %18 : vector<8x384xf32>
    %20 = vector.extract_strided_slice %16 {offsets = [0, 0], sizes = [8, 128], strides = [1, 1]} : vector<8x384xf32> to vector<8x128xf32>
    %21 = vector.extract_strided_slice %19 {offsets = [0, 0], sizes = [8, 128], strides = [1, 1]} : vector<8x384xf32> to vector<8x128xf32>
    %22 = arith.addf %20, %21 : vector<8x128xf32>
    %23 = arith.negf %22 : vector<8x128xf32>
    %24 = math.exp %23 : vector<8x128xf32>
    %cst_19 = arith.constant 1.000000e+00 : f32
    %25 = vector.broadcast %cst_19 : f32 to vector<8x128xf32>
    %26 = arith.addf %25, %24 : vector<8x128xf32>
    %27 = arith.divf %25, %26 : vector<8x128xf32>
    %28 = vector.extract_strided_slice %16 {offsets = [0, 128], sizes = [8, 128], strides = [1, 1]} : vector<8x384xf32> to vector<8x128xf32>
    %29 = vector.extract_strided_slice %19 {offsets = [0, 128], sizes = [8, 128], strides = [1, 1]} : vector<8x384xf32> to vector<8x128xf32>
    %30 = arith.addf %28, %29 : vector<8x128xf32>
    %31 = arith.negf %30 : vector<8x128xf32>
    %32 = math.exp %31 : vector<8x128xf32>
    %cst_20 = arith.constant 1.000000e+00 : f32
    %33 = vector.broadcast %cst_20 : f32 to vector<8x128xf32>
    %34 = arith.addf %33, %32 : vector<8x128xf32>
    %35 = arith.divf %33, %34 : vector<8x128xf32>
    %36 = vector.extract_strided_slice %16 {offsets = [0, 256], sizes = [8, 128], strides = [1, 1]} : vector<8x384xf32> to vector<8x128xf32>
    %37 = vector.extract_strided_slice %19 {offsets = [0, 256], sizes = [8, 128], strides = [1, 1]} : vector<8x384xf32> to vector<8x128xf32>
    %38 = arith.mulf %27, %37 : vector<8x128xf32>
    %39 = arith.addf %36, %38 : vector<8x128xf32>
    %40 = math.tanh %39 : vector<8x128xf32>
    %cst_21 = arith.constant 1.000000e+00 : f32
    %41 = vector.broadcast %cst_21 : f32 to vector<8x128xf32>
    %42 = arith.subf %41, %35 : vector<8x128xf32>
    %43 = arith.mulf %42, %40 : vector<8x128xf32>
    %44 = arith.mulf %35, %15 : vector<8x128xf32>
    %45 = arith.addf %43, %44 : vector<8x128xf32>
    %c0_i32 = arith.constant 0 : i32
    %46 = vector.broadcast %c0_i32 : i32 to vector<8x1xi32>
    %47 = arith.cmpi sgt, %9, %46 : vector<8x1xi32>
    %48 = vector.shape_cast %47 : vector<8x1xi1> to vector<8x1xi1>
    %49 = vector.broadcast %48 : vector<8x1xi1> to vector<8x128xi1>
    %50 = arith.select %49, %45, %15 : vector<8x128xi1>, vector<8x128xf32>
    %51 = vector.extract_strided_slice %14 {offsets = [8, 0], sizes = [8, 384], strides = [1, 1]} : vector<64x384xf32> to vector<8x384xf32>
    %cst_22 = arith.constant dense<0.000000e+00> : vector<8x384xf32>
    %52 = tpu.matmul %50, %3, %cst_22 {dimension_numbers = #tpu.dot_dimension_numbers<[1], [0], [0], [1], [0, 0, 1, 1], [], []>} : vector<8x128xf32>, vector<128x384xf32>, vector<8x384xf32> -> vector<8x384xf32>
    %53 = vector.broadcast %7 : vector<1x384xf32> to vector<8x384xf32>
    %54 = arith.addf %52, %53 : vector<8x384xf32>
    %55 = vector.extract_strided_slice %51 {offsets = [0, 0], sizes = [8, 128], strides = [1, 1]} : vector<8x384xf32> to vector<8x128xf32>
    %56 = vector.extract_strided_slice %54 {offsets = [0, 0], sizes = [8, 128], strides = [1, 1]} : vector<8x384xf32> to vector<8x128xf32>
    %57 = arith.addf %55, %56 : vector<8x128xf32>
    %58 = arith.negf %57 : vector<8x128xf32>
    %59 = math.exp %58 : vector<8x128xf32>
    %cst_23 = arith.constant 1.000000e+00 : f32
    %60 = vector.broadcast %cst_23 : f32 to vector<8x128xf32>
    %61 = arith.addf %60, %59 : vector<8x128xf32>
    %62 = arith.divf %60, %61 : vector<8x128xf32>
    %63 = vector.extract_strided_slice %51 {offsets = [0, 128], sizes = [8, 128], strides = [1, 1]} : vector<8x384xf32> to vector<8x128xf32>
    %64 = vector.extract_strided_slice %54 {offsets = [0, 128], sizes = [8, 128], strides = [1, 1]} : vector<8x384xf32> to vector<8x128xf32>
    %65 = arith.addf %63, %64 : vector<8x128xf32>
    %66 = arith.negf %65 : vector<8x128xf32>
    %67 = math.exp %66 : vector<8x128xf32>
    %cst_24 = arith.constant 1.000000e+00 : f32
    %68 = vector.broadcast %cst_24 : f32 to vector<8x128xf32>
    %69 = arith.addf %68, %67 : vector<8x128xf32>
    %70 = arith.divf %68, %69 : vector<8x128xf32>
    %71 = vector.extract_strided_slice %51 {offsets = [0, 256], sizes = [8, 128], strides = [1, 1]} : vector<8x384xf32> to vector<8x128xf32>
    %72 = vector.extract_strided_slice %54 {offsets = [0, 256], sizes = [8, 128], strides = [1, 1]} : vector<8x384xf32> to vector<8x128xf32>
    %73 = arith.mulf %62, %72 : vector<8x128xf32>
    %74 = arith.addf %71, %73 : vector<8x128xf32>
    %75 = math.tanh %74 : vector<8x128xf32>
    %cst_25 = arith.constant 1.000000e+00 : f32
    %76 = vector.broadcast %cst_25 : f32 to vector<8x128xf32>
    %77 = arith.subf %76, %70 : vector<8x128xf32>
    %78 = arith.mulf %77, %75 : vector<8x128xf32>
    %79 = arith.mulf %70, %50 : vector<8x128xf32>
    %80 = arith.addf %78, %79 : vector<8x128xf32>
    %c1_i32 = arith.constant 1 : i32
    %81 = vector.broadcast %c1_i32 : i32 to vector<8x1xi32>
    %82 = arith.cmpi sgt, %9, %81 : vector<8x1xi32>
    %83 = vector.shape_cast %82 : vector<8x1xi1> to vector<8x1xi1>
    %84 = vector.broadcast %83 : vector<8x1xi1> to vector<8x128xi1>
    %85 = arith.select %84, %80, %50 : vector<8x128xi1>, vector<8x128xf32>
    %86 = vector.extract_strided_slice %14 {offsets = [16, 0], sizes = [8, 384], strides = [1, 1]} : vector<64x384xf32> to vector<8x384xf32>
    %cst_26 = arith.constant dense<0.000000e+00> : vector<8x384xf32>
    %87 = tpu.matmul %85, %3, %cst_26 {dimension_numbers = #tpu.dot_dimension_numbers<[1], [0], [0], [1], [0, 0, 1, 1], [], []>} : vector<8x128xf32>, vector<128x384xf32>, vector<8x384xf32> -> vector<8x384xf32>
    %88 = vector.broadcast %7 : vector<1x384xf32> to vector<8x384xf32>
    %89 = arith.addf %87, %88 : vector<8x384xf32>
    %90 = vector.extract_strided_slice %86 {offsets = [0, 0], sizes = [8, 128], strides = [1, 1]} : vector<8x384xf32> to vector<8x128xf32>
    %91 = vector.extract_strided_slice %89 {offsets = [0, 0], sizes = [8, 128], strides = [1, 1]} : vector<8x384xf32> to vector<8x128xf32>
    %92 = arith.addf %90, %91 : vector<8x128xf32>
    %93 = arith.negf %92 : vector<8x128xf32>
    %94 = math.exp %93 : vector<8x128xf32>
    %cst_27 = arith.constant 1.000000e+00 : f32
    %95 = vector.broadcast %cst_27 : f32 to vector<8x128xf32>
    %96 = arith.addf %95, %94 : vector<8x128xf32>
    %97 = arith.divf %95, %96 : vector<8x128xf32>
    %98 = vector.extract_strided_slice %86 {offsets = [0, 128], sizes = [8, 128], strides = [1, 1]} : vector<8x384xf32> to vector<8x128xf32>
    %99 = vector.extract_strided_slice %89 {offsets = [0, 128], sizes = [8, 128], strides = [1, 1]} : vector<8x384xf32> to vector<8x128xf32>
    %100 = arith.addf %98, %99 : vector<8x128xf32>
    %101 = arith.negf %100 : vector<8x128xf32>
    %102 = math.exp %101 : vector<8x128xf32>
    %cst_28 = arith.constant 1.000000e+00 : f32
    %103 = vector.broadcast %cst_28 : f32 to vector<8x128xf32>
    %104 = arith.addf %103, %102 : vector<8x128xf32>
    %105 = arith.divf %103, %104 : vector<8x128xf32>
    %106 = vector.extract_strided_slice %86 {offsets = [0, 256], sizes = [8, 128], strides = [1, 1]} : vector<8x384xf32> to vector<8x128xf32>
    %107 = vector.extract_strided_slice %89 {offsets = [0, 256], sizes = [8, 128], strides = [1, 1]} : vector<8x384xf32> to vector<8x128xf32>
    %108 = arith.mulf %97, %107 : vector<8x128xf32>
    %109 = arith.addf %106, %108 : vector<8x128xf32>
    %110 = math.tanh %109 : vector<8x128xf32>
    %cst_29 = arith.constant 1.000000e+00 : f32
    %111 = vector.broadcast %cst_29 : f32 to vector<8x128xf32>
    %112 = arith.subf %111, %105 : vector<8x128xf32>
    %113 = arith.mulf %112, %110 : vector<8x128xf32>
    %114 = arith.mulf %105, %85 : vector<8x128xf32>
    %115 = arith.addf %113, %114 : vector<8x128xf32>
    %c2_i32 = arith.constant 2 : i32
    %116 = vector.broadcast %c2_i32 : i32 to vector<8x1xi32>
    %117 = arith.cmpi sgt, %9, %116 : vector<8x1xi32>
    %118 = vector.shape_cast %117 : vector<8x1xi1> to vector<8x1xi1>
    %119 = vector.broadcast %118 : vector<8x1xi1> to vector<8x128xi1>
    %120 = arith.select %119, %115, %85 : vector<8x128xi1>, vector<8x128xf32>
    %121 = vector.extract_strided_slice %14 {offsets = [24, 0], sizes = [8, 384], strides = [1, 1]} : vector<64x384xf32> to vector<8x384xf32>
    %cst_30 = arith.constant dense<0.000000e+00> : vector<8x384xf32>
    %122 = tpu.matmul %120, %3, %cst_30 {dimension_numbers = #tpu.dot_dimension_numbers<[1], [0], [0], [1], [0, 0, 1, 1], [], []>} : vector<8x128xf32>, vector<128x384xf32>, vector<8x384xf32> -> vector<8x384xf32>
    %123 = vector.broadcast %7 : vector<1x384xf32> to vector<8x384xf32>
    %124 = arith.addf %122, %123 : vector<8x384xf32>
    %125 = vector.extract_strided_slice %121 {offsets = [0, 0], sizes = [8, 128], strides = [1, 1]} : vector<8x384xf32> to vector<8x128xf32>
    %126 = vector.extract_strided_slice %124 {offsets = [0, 0], sizes = [8, 128], strides = [1, 1]} : vector<8x384xf32> to vector<8x128xf32>
    %127 = arith.addf %125, %126 : vector<8x128xf32>
    %128 = arith.negf %127 : vector<8x128xf32>
    %129 = math.exp %128 : vector<8x128xf32>
    %cst_31 = arith.constant 1.000000e+00 : f32
    %130 = vector.broadcast %cst_31 : f32 to vector<8x128xf32>
    %131 = arith.addf %130, %129 : vector<8x128xf32>
    %132 = arith.divf %130, %131 : vector<8x128xf32>
    %133 = vector.extract_strided_slice %121 {offsets = [0, 128], sizes = [8, 128], strides = [1, 1]} : vector<8x384xf32> to vector<8x128xf32>
    %134 = vector.extract_strided_slice %124 {offsets = [0, 128], sizes = [8, 128], strides = [1, 1]} : vector<8x384xf32> to vector<8x128xf32>
    %135 = arith.addf %133, %134 : vector<8x128xf32>
    %136 = arith.negf %135 : vector<8x128xf32>
    %137 = math.exp %136 : vector<8x128xf32>
    %cst_32 = arith.constant 1.000000e+00 : f32
    %138 = vector.broadcast %cst_32 : f32 to vector<8x128xf32>
    %139 = arith.addf %138, %137 : vector<8x128xf32>
    %140 = arith.divf %138, %139 : vector<8x128xf32>
    %141 = vector.extract_strided_slice %121 {offsets = [0, 256], sizes = [8, 128], strides = [1, 1]} : vector<8x384xf32> to vector<8x128xf32>
    %142 = vector.extract_strided_slice %124 {offsets = [0, 256], sizes = [8, 128], strides = [1, 1]} : vector<8x384xf32> to vector<8x128xf32>
    %143 = arith.mulf %132, %142 : vector<8x128xf32>
    %144 = arith.addf %141, %143 : vector<8x128xf32>
    %145 = math.tanh %144 : vector<8x128xf32>
    %cst_33 = arith.constant 1.000000e+00 : f32
    %146 = vector.broadcast %cst_33 : f32 to vector<8x128xf32>
    %147 = arith.subf %146, %140 : vector<8x128xf32>
    %148 = arith.mulf %147, %145 : vector<8x128xf32>
    %149 = arith.mulf %140, %120 : vector<8x128xf32>
    %150 = arith.addf %148, %149 : vector<8x128xf32>
    %c3_i32 = arith.constant 3 : i32
    %151 = vector.broadcast %c3_i32 : i32 to vector<8x1xi32>
    %152 = arith.cmpi sgt, %9, %151 : vector<8x1xi32>
    %153 = vector.shape_cast %152 : vector<8x1xi1> to vector<8x1xi1>
    %154 = vector.broadcast %153 : vector<8x1xi1> to vector<8x128xi1>
    %155 = arith.select %154, %150, %120 : vector<8x128xi1>, vector<8x128xf32>
    %156 = vector.extract_strided_slice %14 {offsets = [32, 0], sizes = [8, 384], strides = [1, 1]} : vector<64x384xf32> to vector<8x384xf32>
    %cst_34 = arith.constant dense<0.000000e+00> : vector<8x384xf32>
    %157 = tpu.matmul %155, %3, %cst_34 {dimension_numbers = #tpu.dot_dimension_numbers<[1], [0], [0], [1], [0, 0, 1, 1], [], []>} : vector<8x128xf32>, vector<128x384xf32>, vector<8x384xf32> -> vector<8x384xf32>
    %158 = vector.broadcast %7 : vector<1x384xf32> to vector<8x384xf32>
    %159 = arith.addf %157, %158 : vector<8x384xf32>
    %160 = vector.extract_strided_slice %156 {offsets = [0, 0], sizes = [8, 128], strides = [1, 1]} : vector<8x384xf32> to vector<8x128xf32>
    %161 = vector.extract_strided_slice %159 {offsets = [0, 0], sizes = [8, 128], strides = [1, 1]} : vector<8x384xf32> to vector<8x128xf32>
    %162 = arith.addf %160, %161 : vector<8x128xf32>
    %163 = arith.negf %162 : vector<8x128xf32>
    %164 = math.exp %163 : vector<8x128xf32>
    %cst_35 = arith.constant 1.000000e+00 : f32
    %165 = vector.broadcast %cst_35 : f32 to vector<8x128xf32>
    %166 = arith.addf %165, %164 : vector<8x128xf32>
    %167 = arith.divf %165, %166 : vector<8x128xf32>
    %168 = vector.extract_strided_slice %156 {offsets = [0, 128], sizes = [8, 128], strides = [1, 1]} : vector<8x384xf32> to vector<8x128xf32>
    %169 = vector.extract_strided_slice %159 {offsets = [0, 128], sizes = [8, 128], strides = [1, 1]} : vector<8x384xf32> to vector<8x128xf32>
    %170 = arith.addf %168, %169 : vector<8x128xf32>
    %171 = arith.negf %170 : vector<8x128xf32>
    %172 = math.exp %171 : vector<8x128xf32>
    %cst_36 = arith.constant 1.000000e+00 : f32
    %173 = vector.broadcast %cst_36 : f32 to vector<8x128xf32>
    %174 = arith.addf %173, %172 : vector<8x128xf32>
    %175 = arith.divf %173, %174 : vector<8x128xf32>
    %176 = vector.extract_strided_slice %156 {offsets = [0, 256], sizes = [8, 128], strides = [1, 1]} : vector<8x384xf32> to vector<8x128xf32>
    %177 = vector.extract_strided_slice %159 {offsets = [0, 256], sizes = [8, 128], strides = [1, 1]} : vector<8x384xf32> to vector<8x128xf32>
    %178 = arith.mulf %167, %177 : vector<8x128xf32>
    %179 = arith.addf %176, %178 : vector<8x128xf32>
    %180 = math.tanh %179 : vector<8x128xf32>
    %cst_37 = arith.constant 1.000000e+00 : f32
    %181 = vector.broadcast %cst_37 : f32 to vector<8x128xf32>
    %182 = arith.subf %181, %175 : vector<8x128xf32>
    %183 = arith.mulf %182, %180 : vector<8x128xf32>
    %184 = arith.mulf %175, %155 : vector<8x128xf32>
    %185 = arith.addf %183, %184 : vector<8x128xf32>
    %c4_i32 = arith.constant 4 : i32
    %186 = vector.broadcast %c4_i32 : i32 to vector<8x1xi32>
    %187 = arith.cmpi sgt, %9, %186 : vector<8x1xi32>
    %188 = vector.shape_cast %187 : vector<8x1xi1> to vector<8x1xi1>
    %189 = vector.broadcast %188 : vector<8x1xi1> to vector<8x128xi1>
    %190 = arith.select %189, %185, %155 : vector<8x128xi1>, vector<8x128xf32>
    %191 = vector.extract_strided_slice %14 {offsets = [40, 0], sizes = [8, 384], strides = [1, 1]} : vector<64x384xf32> to vector<8x384xf32>
    %cst_38 = arith.constant dense<0.000000e+00> : vector<8x384xf32>
    %192 = tpu.matmul %190, %3, %cst_38 {dimension_numbers = #tpu.dot_dimension_numbers<[1], [0], [0], [1], [0, 0, 1, 1], [], []>} : vector<8x128xf32>, vector<128x384xf32>, vector<8x384xf32> -> vector<8x384xf32>
    %193 = vector.broadcast %7 : vector<1x384xf32> to vector<8x384xf32>
    %194 = arith.addf %192, %193 : vector<8x384xf32>
    %195 = vector.extract_strided_slice %191 {offsets = [0, 0], sizes = [8, 128], strides = [1, 1]} : vector<8x384xf32> to vector<8x128xf32>
    %196 = vector.extract_strided_slice %194 {offsets = [0, 0], sizes = [8, 128], strides = [1, 1]} : vector<8x384xf32> to vector<8x128xf32>
    %197 = arith.addf %195, %196 : vector<8x128xf32>
    %198 = arith.negf %197 : vector<8x128xf32>
    %199 = math.exp %198 : vector<8x128xf32>
    %cst_39 = arith.constant 1.000000e+00 : f32
    %200 = vector.broadcast %cst_39 : f32 to vector<8x128xf32>
    %201 = arith.addf %200, %199 : vector<8x128xf32>
    %202 = arith.divf %200, %201 : vector<8x128xf32>
    %203 = vector.extract_strided_slice %191 {offsets = [0, 128], sizes = [8, 128], strides = [1, 1]} : vector<8x384xf32> to vector<8x128xf32>
    %204 = vector.extract_strided_slice %194 {offsets = [0, 128], sizes = [8, 128], strides = [1, 1]} : vector<8x384xf32> to vector<8x128xf32>
    %205 = arith.addf %203, %204 : vector<8x128xf32>
    %206 = arith.negf %205 : vector<8x128xf32>
    %207 = math.exp %206 : vector<8x128xf32>
    %cst_40 = arith.constant 1.000000e+00 : f32
    %208 = vector.broadcast %cst_40 : f32 to vector<8x128xf32>
    %209 = arith.addf %208, %207 : vector<8x128xf32>
    %210 = arith.divf %208, %209 : vector<8x128xf32>
    %211 = vector.extract_strided_slice %191 {offsets = [0, 256], sizes = [8, 128], strides = [1, 1]} : vector<8x384xf32> to vector<8x128xf32>
    %212 = vector.extract_strided_slice %194 {offsets = [0, 256], sizes = [8, 128], strides = [1, 1]} : vector<8x384xf32> to vector<8x128xf32>
    %213 = arith.mulf %202, %212 : vector<8x128xf32>
    %214 = arith.addf %211, %213 : vector<8x128xf32>
    %215 = math.tanh %214 : vector<8x128xf32>
    %cst_41 = arith.constant 1.000000e+00 : f32
    %216 = vector.broadcast %cst_41 : f32 to vector<8x128xf32>
    %217 = arith.subf %216, %210 : vector<8x128xf32>
    %218 = arith.mulf %217, %215 : vector<8x128xf32>
    %219 = arith.mulf %210, %190 : vector<8x128xf32>
    %220 = arith.addf %218, %219 : vector<8x128xf32>
    %c5_i32 = arith.constant 5 : i32
    %221 = vector.broadcast %c5_i32 : i32 to vector<8x1xi32>
    %222 = arith.cmpi sgt, %9, %221 : vector<8x1xi32>
    %223 = vector.shape_cast %222 : vector<8x1xi1> to vector<8x1xi1>
    %224 = vector.broadcast %223 : vector<8x1xi1> to vector<8x128xi1>
    %225 = arith.select %224, %220, %190 : vector<8x128xi1>, vector<8x128xf32>
    %226 = vector.extract_strided_slice %14 {offsets = [48, 0], sizes = [8, 384], strides = [1, 1]} : vector<64x384xf32> to vector<8x384xf32>
    %cst_42 = arith.constant dense<0.000000e+00> : vector<8x384xf32>
    %227 = tpu.matmul %225, %3, %cst_42 {dimension_numbers = #tpu.dot_dimension_numbers<[1], [0], [0], [1], [0, 0, 1, 1], [], []>} : vector<8x128xf32>, vector<128x384xf32>, vector<8x384xf32> -> vector<8x384xf32>
    %228 = vector.broadcast %7 : vector<1x384xf32> to vector<8x384xf32>
    %229 = arith.addf %227, %228 : vector<8x384xf32>
    %230 = vector.extract_strided_slice %226 {offsets = [0, 0], sizes = [8, 128], strides = [1, 1]} : vector<8x384xf32> to vector<8x128xf32>
    %231 = vector.extract_strided_slice %229 {offsets = [0, 0], sizes = [8, 128], strides = [1, 1]} : vector<8x384xf32> to vector<8x128xf32>
    %232 = arith.addf %230, %231 : vector<8x128xf32>
    %233 = arith.negf %232 : vector<8x128xf32>
    %234 = math.exp %233 : vector<8x128xf32>
    %cst_43 = arith.constant 1.000000e+00 : f32
    %235 = vector.broadcast %cst_43 : f32 to vector<8x128xf32>
    %236 = arith.addf %235, %234 : vector<8x128xf32>
    %237 = arith.divf %235, %236 : vector<8x128xf32>
    %238 = vector.extract_strided_slice %226 {offsets = [0, 128], sizes = [8, 128], strides = [1, 1]} : vector<8x384xf32> to vector<8x128xf32>
    %239 = vector.extract_strided_slice %229 {offsets = [0, 128], sizes = [8, 128], strides = [1, 1]} : vector<8x384xf32> to vector<8x128xf32>
    %240 = arith.addf %238, %239 : vector<8x128xf32>
    %241 = arith.negf %240 : vector<8x128xf32>
    %242 = math.exp %241 : vector<8x128xf32>
    %cst_44 = arith.constant 1.000000e+00 : f32
    %243 = vector.broadcast %cst_44 : f32 to vector<8x128xf32>
    %244 = arith.addf %243, %242 : vector<8x128xf32>
    %245 = arith.divf %243, %244 : vector<8x128xf32>
    %246 = vector.extract_strided_slice %226 {offsets = [0, 256], sizes = [8, 128], strides = [1, 1]} : vector<8x384xf32> to vector<8x128xf32>
    %247 = vector.extract_strided_slice %229 {offsets = [0, 256], sizes = [8, 128], strides = [1, 1]} : vector<8x384xf32> to vector<8x128xf32>
    %248 = arith.mulf %237, %247 : vector<8x128xf32>
    %249 = arith.addf %246, %248 : vector<8x128xf32>
    %250 = math.tanh %249 : vector<8x128xf32>
    %cst_45 = arith.constant 1.000000e+00 : f32
    %251 = vector.broadcast %cst_45 : f32 to vector<8x128xf32>
    %252 = arith.subf %251, %245 : vector<8x128xf32>
    %253 = arith.mulf %252, %250 : vector<8x128xf32>
    %254 = arith.mulf %245, %225 : vector<8x128xf32>
    %255 = arith.addf %253, %254 : vector<8x128xf32>
    %c6_i32 = arith.constant 6 : i32
    %256 = vector.broadcast %c6_i32 : i32 to vector<8x1xi32>
    %257 = arith.cmpi sgt, %9, %256 : vector<8x1xi32>
    %258 = vector.shape_cast %257 : vector<8x1xi1> to vector<8x1xi1>
    %259 = vector.broadcast %258 : vector<8x1xi1> to vector<8x128xi1>
    %260 = arith.select %259, %255, %225 : vector<8x128xi1>, vector<8x128xf32>
    %261 = vector.extract_strided_slice %14 {offsets = [56, 0], sizes = [8, 384], strides = [1, 1]} : vector<64x384xf32> to vector<8x384xf32>
    %cst_46 = arith.constant dense<0.000000e+00> : vector<8x384xf32>
    %262 = tpu.matmul %260, %3, %cst_46 {dimension_numbers = #tpu.dot_dimension_numbers<[1], [0], [0], [1], [0, 0, 1, 1], [], []>} : vector<8x128xf32>, vector<128x384xf32>, vector<8x384xf32> -> vector<8x384xf32>
    %263 = vector.broadcast %7 : vector<1x384xf32> to vector<8x384xf32>
    %264 = arith.addf %262, %263 : vector<8x384xf32>
    %265 = vector.extract_strided_slice %261 {offsets = [0, 0], sizes = [8, 128], strides = [1, 1]} : vector<8x384xf32> to vector<8x128xf32>
    %266 = vector.extract_strided_slice %264 {offsets = [0, 0], sizes = [8, 128], strides = [1, 1]} : vector<8x384xf32> to vector<8x128xf32>
    %267 = arith.addf %265, %266 : vector<8x128xf32>
    %268 = arith.negf %267 : vector<8x128xf32>
    %269 = math.exp %268 : vector<8x128xf32>
    %cst_47 = arith.constant 1.000000e+00 : f32
    %270 = vector.broadcast %cst_47 : f32 to vector<8x128xf32>
    %271 = arith.addf %270, %269 : vector<8x128xf32>
    %272 = arith.divf %270, %271 : vector<8x128xf32>
    %273 = vector.extract_strided_slice %261 {offsets = [0, 128], sizes = [8, 128], strides = [1, 1]} : vector<8x384xf32> to vector<8x128xf32>
    %274 = vector.extract_strided_slice %264 {offsets = [0, 128], sizes = [8, 128], strides = [1, 1]} : vector<8x384xf32> to vector<8x128xf32>
    %275 = arith.addf %273, %274 : vector<8x128xf32>
    %276 = arith.negf %275 : vector<8x128xf32>
    %277 = math.exp %276 : vector<8x128xf32>
    %cst_48 = arith.constant 1.000000e+00 : f32
    %278 = vector.broadcast %cst_48 : f32 to vector<8x128xf32>
    %279 = arith.addf %278, %277 : vector<8x128xf32>
    %280 = arith.divf %278, %279 : vector<8x128xf32>
    %281 = vector.extract_strided_slice %261 {offsets = [0, 256], sizes = [8, 128], strides = [1, 1]} : vector<8x384xf32> to vector<8x128xf32>
    %282 = vector.extract_strided_slice %264 {offsets = [0, 256], sizes = [8, 128], strides = [1, 1]} : vector<8x384xf32> to vector<8x128xf32>
    %283 = arith.mulf %272, %282 : vector<8x128xf32>
    %284 = arith.addf %281, %283 : vector<8x128xf32>
    %285 = math.tanh %284 : vector<8x128xf32>
    %cst_49 = arith.constant 1.000000e+00 : f32
    %286 = vector.broadcast %cst_49 : f32 to vector<8x128xf32>
    %287 = arith.subf %286, %280 : vector<8x128xf32>
    %288 = arith.mulf %287, %285 : vector<8x128xf32>
    %289 = arith.mulf %280, %260 : vector<8x128xf32>
    %290 = arith.addf %288, %289 : vector<8x128xf32>
    %c7_i32 = arith.constant 7 : i32
    %291 = vector.broadcast %c7_i32 : i32 to vector<8x1xi32>
    %292 = arith.cmpi sgt, %9, %291 : vector<8x1xi32>
    %293 = vector.shape_cast %292 : vector<8x1xi1> to vector<8x1xi1>
    %294 = vector.broadcast %293 : vector<8x1xi1> to vector<8x128xi1>
    %295 = arith.select %294, %290, %260 : vector<8x128xi1>, vector<8x128xf32>
    %c0_50 = arith.constant 0 : index
    %c0_51 = arith.constant 0 : index
    %c0_52 = arith.constant 0 : index
    %296 = vector.load %arg7[%c0_50, %c0_51, %c0_52] : memref<1x8x128xf32, #tpu.memory_space<vmem>>, vector<1x8x128xf32>
    %297 = vector.shape_cast %296 : vector<1x8x128xf32> to vector<8x128xf32>
    %298 = vector.shape_cast %295 : vector<8x128xf32> to vector<1x8x128xf32>
    tpu.vector_store %arg7[%c0_50, %c0_51, %c0_52], %298 {strides = array<i32>} : memref<1x8x128xf32, #tpu.memory_space<vmem>>, vector<1x8x128xf32>,
    return
  }
  func.func @transform_0(%arg0: i32) -> (i32, i32, i32) {
    %c0_i32 = arith.constant 0 : i32
    %c0_i32_0 = arith.constant 0 : i32
    %c0_i32_1 = arith.constant 0 : i32
    return %arg0, %c0_i32, %c0_i32_0 : i32, i32, i32
  }
  func.func @transform_1(%arg0: i32) -> (i32, i32, i32) {
    %c0_i32 = arith.constant 0 : i32
    %c0_i32_0 = arith.constant 0 : i32
    %c0_i32_1 = arith.constant 0 : i32
    return %arg0, %c0_i32, %c0_i32_0 : i32, i32, i32
  }
  func.func @transform_2(%arg0: i32) -> (i32, i32, i32) {
    %c0_i32 = arith.constant 0 : i32
    %c0_i32_0 = arith.constant 0 : i32
    %c0_i32_1 = arith.constant 0 : i32
    return %arg0, %c0_i32, %c0_i32_0 : i32, i32, i32
  }
  func.func @transform_3(%arg0: i32) -> (i32, i32, i32) {
    %c0_i32 = arith.constant 0 : i32
    %c0_i32_0 = arith.constant 0 : i32
    %c0_i32_1 = arith.constant 0 : i32
    return %arg0, %c0_i32, %c0_i32_0 : i32, i32, i32
  }
  func.func @transform_4(%arg0: i32) -> (i32, i32, i32) {
    %c0_i32 = arith.constant 0 : i32
    %c0_i32_0 = arith.constant 0 : i32
    %c0_i32_1 = arith.constant 0 : i32
    return %arg0, %c0_i32, %c0_i32_0 : i32, i32, i32
  }
  func.func @transform_5(%arg0: i32) -> (i32, i32, i32) {
    %c0_i32 = arith.constant 0 : i32
    %c0_i32_0 = arith.constant 0 : i32
    %c0_i32_1 = arith.constant 0 : i32
    return %arg0, %c0_i32, %c0_i32_0 : i32, i32, i32
  }
  func.func @transform_6(%arg0: i32) -> (i32, i32, i32) {
    %c0_i32 = arith.constant 0 : i32
    %c0_i32_0 = arith.constant 0 : i32
    %c0_i32_1 = arith.constant 0 : i32
    return %arg0, %c0_i32, %c0_i32_0 : i32, i32, i32
  }
}

</mosaic_0001>

<llo_original>
// kernel: tpu_custom_call.1
$region0: #{tpu_custom_call.1}
  #allocation0 [shape = 'u32[]', space=smem, size = 0x4, offset = 0x4, fixed_abs, tag = 'smem constant byte address 0x4 - core index']
  #allocation1 [shape = 'u32[144,128]{1,0:T(1,128)}', space=vmem, size = 0x12000, scoped, tag = 'internal scratch']
  %s0 = inlined_call_operand.vmem [shape: f32[4,64,32], index: 0, kind: input, shape index: {}]
  %s1 = inlined_call_operand.vmem [shape: s32[4,8,1], index: 1, kind: input, shape index: {}]
  %s2 = inlined_call_operand.vmem [shape: f32[4,32,384], index: 2, kind: input, shape index: {}]
  %s3 = inlined_call_operand.hbm [shape: f32[4,128,384], index: 3, kind: input, shape index: {}]
  %s4 = inlined_call_operand.vmem [shape: f32[4,1,384], index: 4, kind: input, shape index: {}]
  %s5 = inlined_call_operand.vmem [shape: f32[4,1,384], index: 5, kind: input, shape index: {}]
  %s6 = inlined_call_operand.hbm [shape: f32[4,8,128], index: 6, kind: output, shape index: {}]
  %s7 = sld [smem:[#allocation0]]
  $region61: #{tpu_custom_call.1} parent=0
    _
  %s9 = ssub.s32 1, %s7
  %s10 = scalar_select 0, %s9, %s7
  $region1: #{tpu_custom_call.1} parent=0
    #allocation2 [shape = 'u8[393216]{0}', space=vmem, size = 0x60000, scoped, tag = 'input window, operand 3']
    #allocation3 [shape = 's32[2]{0}', space=sflag, size = 0x8, scoped, tag = 'scoped memory for tpu_custom_call.1']
    #allocation4 [shape = 's32[2]{0}', space=sflag, size = 0x8, scoped, tag = 'scoped memory for tpu_custom_call.1']
    #allocation5 [shape = 'u8[8192]{0}', space=vmem, size = 0x2000, scoped, tag = 'output window, operand 0']
    %11 = vsyncpa [#allocation3], 0
    %s12 = scalar_lea.sflag [#allocation3], 1
    %13 = vsyncpa %s12, 0
    %14 = vsyncpa [#allocation4], 0
    %s15 = scalar_lea.sflag [#allocation4], 1
    %16 = vsyncpa %s15, 0
    loop: start=0, step=1, limit=6
    $region2: #{tpu_custom_call.1} parent=1 // loop_pre_header
      _
    $region3: #{tpu_custom_call.1} parent=1 // loop_header
      %s18 = sphi 0, %s22
      %p19 = scmp.ge.s32.totalorder %s18, 6
      %s28 = sphi 0, %s30
      %s31 = sphi 0, %s28
      %s32 = sphi 0, %s31
      %s48 = sphi 0, %s32
      %s54 = sphi 0, %s56
      %s57 = sphi 0, %s54
      %s58 = sphi 0, %s57
      %s74 = sphi 0, %s58
      %s80 = sphi 0, %s82
      %s83 = sphi 0, %s80
      %s84 = sphi 0, %s83
      %s100 = sphi 0, %s84
      %s106 = sphi 0, %s108
      %s109 = sphi 0, %s106
      %s110 = sphi 0, %s109
      %s126 = sphi 0, %s110
      %s132 = sphi 0, %s134
      %s135 = sphi 0, %s132
      %s136 = sphi 0, %s135
      %s152 = sphi 0, %s136
      %s158 = sphi 0, %s160
      %s161 = sphi 0, %s158
      %s162 = sphi 0, %s161
      %s178 = sphi 0, %s162
      %s184 = sphi 0, %s186
      %s187 = sphi 0, %s184
      %s188 = sphi 0, %s187
      %s204 = sphi 0, %s188
    $region4: #{tpu_custom_call.1} parent=1 // loop_header_branch
      %21 = sbr.rel (%p19) target = $region8
    $region5: #{tpu_custom_call.1} parent=1 // loop_body
      %s23 = ssub.s32 %s18, 1
      %s24 = ssub.s32 %s18, 2
      %s25 = sadd.s32 %s18, 1
      %s26 = ssub.s32 %s18, %s25
      %p27 = scmp.eq.s32.totalorder %s26, 0
      %s29 = sadd.s32 %s28, 1
      %s30 = scalar_select %p27, %s28, %s29
      %p33 = pneg %p27
      %p34 = scmp.eq.s32.totalorder %s18, 3
      %p35 = por %p33, %p34
      %p36 = scmp.ne.s32.totalorder %s28, %s31
      %p37 = scmp.eq.s32.totalorder %s18, 0
      %p38 = por %p36, %p37
      %p39 = scmp.ne.s32.totalorder %s28, %s31
      %p40 = scmp.eq.s32.totalorder %s23, 3
      %p41 = por %p39, %p40
      %p42 = scmp.ne.s32.totalorder %s31, %s32
      %p43 = scmp.eq.s32.totalorder %s23, 0
      %p44 = por %p42, %p43
      %p45 = scmp.ne.s32.totalorder %s31, %s32
      %p46 = scmp.eq.s32.totalorder %s24, 3
      %p47 = por %p45, %p46
      %p49 = scmp.ne.s32.totalorder %s32, %s48
      %p50 = scmp.eq.s32.totalorder %s24, 0
      %p51 = por %p49, %p50
      %s52 = ssub.s32 %s18, %s25
      %p53 = scmp.eq.s32.totalorder %s52, 0
      %s55 = sadd.s32 %s54, 1
      %s56 = scalar_select %p53, %s54, %s55
      %p59 = pneg %p53
      %p60 = scmp.eq.s32.totalorder %s18, 3
      %p61 = por %p59, %p60
      %p62 = scmp.ne.s32.totalorder %s54, %s57
      %p63 = scmp.eq.s32.totalorder %s18, 0
      %p64 = por %p62, %p63
      %p65 = scmp.ne.s32.totalorder %s54, %s57
      %p66 = scmp.eq.s32.totalorder %s23, 3
      %p67 = por %p65, %p66
      %p68 = scmp.ne.s32.totalorder %s57, %s58
      %p69 = scmp.eq.s32.totalorder %s23, 0
      %p70 = por %p68, %p69
      %p71 = scmp.ne.s32.totalorder %s57, %s58
      %p72 = scmp.eq.s32.totalorder %s24, 3
      %p73 = por %p71, %p72
      %p75 = scmp.ne.s32.totalorder %s58, %s74
      %p76 = scmp.eq.s32.totalorder %s24, 0
      %p77 = por %p75, %p76
      %s78 = ssub.s32 %s18, %s25
      %p79 = scmp.eq.s32.totalorder %s78, 0
      %s81 = sadd.s32 %s80, 1
      %s82 = scalar_select %p79, %s80, %s81
      %p85 = pneg %p79
      %p86 = scmp.eq.s32.totalorder %s18, 3
      %p87 = por %p85, %p86
      %p88 = scmp.ne.s32.totalorder %s80, %s83
      %p89 = scmp.eq.s32.totalorder %s18, 0
      %p90 = por %p88, %p89
      %p91 = scmp.ne.s32.totalorder %s80, %s83
      %p92 = scmp.eq.s32.totalorder %s23, 3
      %p93 = por %p91, %p92
      %p94 = scmp.ne.s32.totalorder %s83, %s84
      %p95 = scmp.eq.s32.totalorder %s23, 0
      %p96 = por %p94, %p95
      %p97 = scmp.ne.s32.totalorder %s83, %s84
      %p98 = scmp.eq.s32.totalorder %s24, 3
      %p99 = por %p97, %p98
      %p101 = scmp.ne.s32.totalorder %s84, %s100
      %p102 = scmp.eq.s32.totalorder %s24, 0
      %p103 = por %p101, %p102
      %s104 = ssub.s32 %s18, %s25
      %p105 = scmp.eq.s32.totalorder %s104, 0
      %s107 = sadd.s32 %s106, 1
      %s108 = scalar_select %p105, %s106, %s107
      %p111 = pneg %p105
      %p112 = scmp.eq.s32.totalorder %s18, 3
      %p113 = por %p111, %p112
      %p114 = scmp.ne.s32.totalorder %s106, %s109
      %p115 = scmp.eq.s32.totalorder %s18, 0
      %p116 = por %p114, %p115
      %p117 = scmp.ne.s32.totalorder %s106, %s109
      %p118 = scmp.eq.s32.totalorder %s23, 3
      %p119 = por %p117, %p118
      %p120 = scmp.ne.s32.totalorder %s109, %s110
      %p121 = scmp.eq.s32.totalorder %s23, 0
      %p122 = por %p120, %p121
      %p123 = scmp.ne.s32.totalorder %s109, %s110
      %p124 = scmp.eq.s32.totalorder %s24, 3
      %p125 = por %p123, %p124
      %p127 = scmp.ne.s32.totalorder %s110, %s126
      %p128 = scmp.eq.s32.totalorder %s24, 0
      %p129 = por %p127, %p128
      %s130 = ssub.s32 %s18, %s25
      %p131 = scmp.eq.s32.totalorder %s130, 0
      %s133 = sadd.s32 %s132, 1
      %s134 = scalar_select %p131, %s132, %s133
      %p137 = pneg %p131
      %p138 = scmp.eq.s32.totalorder %s18, 3
      %p139 = por %p137, %p138
      %p140 = scmp.ne.s32.totalorder %s132, %s135
      %p141 = scmp.eq.s32.totalorder %s18, 0
      %p142 = por %p140, %p141
      %p143 = scmp.ne.s32.totalorder %s132, %s135
      %p144 = scmp.eq.s32.totalorder %s23, 3
      %p145 = por %p143, %p144
      %p146 = scmp.ne.s32.totalorder %s135, %s136
      %p147 = scmp.eq.s32.totalorder %s23, 0
      %p148 = por %p146, %p147
      %p149 = scmp.ne.s32.totalorder %s135, %s136
      %p150 = scmp.eq.s32.totalorder %s24, 3
      %p151 = por %p149, %p150
      %p153 = scmp.ne.s32.totalorder %s136, %s152
      %p154 = scmp.eq.s32.totalorder %s24, 0
      %p155 = por %p153, %p154
      %s156 = ssub.s32 %s18, %s25
      %p157 = scmp.eq.s32.totalorder %s156, 0
      %s159 = sadd.s32 %s158, 1
      %s160 = scalar_select %p157, %s158, %s159
      %p163 = pneg %p157
      %p164 = scmp.eq.s32.totalorder %s18, 3
      %p165 = por %p163, %p164
      %p166 = scmp.ne.s32.totalorder %s158, %s161
      %p167 = scmp.eq.s32.totalorder %s18, 0
      %p168 = por %p166, %p167
      %p169 = scmp.ne.s32.totalorder %s158, %s161
      %p170 = scmp.eq.s32.totalorder %s23, 3
      %p171 = por %p169, %p170
      %p172 = scmp.ne.s32.totalorder %s161, %s162
      %p173 = scmp.eq.s32.totalorder %s23, 0
      %p174 = por %p172, %p173
      %p175 = scmp.ne.s32.totalorder %s161, %s162
      %p176 = scmp.eq.s32.totalorder %s24, 3
      %p177 = por %p175, %p176
      %p179 = scmp.ne.s32.totalorder %s162, %s178
      %p180 = scmp.eq.s32.totalorder %s24, 0
      %p181 = por %p179, %p180
      %s182 = ssub.s32 %s18, %s25
      %p183 = scmp.eq.s32.totalorder %s182, 0
      %s185 = sadd.s32 %s184, 1
      %s186 = scalar_select %p183, %s184, %s185
      %p189 = pneg %p183
      %p190 = scmp.eq.s32.totalorder %s18, 3
      %p191 = por %p189, %p190
      %p192 = scmp.ne.s32.totalorder %s184, %s187
      %p193 = scmp.eq.s32.totalorder %s18, 0
      %p194 = por %p192, %p193
      %p195 = scmp.ne.s32.totalorder %s184, %s187
      %p196 = scmp.eq.s32.totalorder %s23, 3
      %p197 = por %p195, %p196
      %p198 = scmp.ne.s32.totalorder %s187, %s188
      %p199 = scmp.eq.s32.totalorder %s23, 0
      %p200 = por %p198, %p199
      %p201 = scmp.ne.s32.totalorder %s187, %s188
      %p202 = scmp.eq.s32.totalorder %s24, 3
      %p203 = por %p201, %p202
      %p205 = scmp.ne.s32.totalorder %s188, %s204
      %p206 = scmp.eq.s32.totalorder %s24, 0
      %p207 = por %p205, %p206
      %p208 = scmp.le.s32.totalorder 1, %s18
      %p209 = scmp.lt.s32.totalorder %s18, 5
      %p210 = pnand %p208, %p209
      %p211 = pneg %p210
      // Predicated region
      $region9: #{tpu_custom_call.1} parent=5 // pred_check
        _
      $region10: #{tpu_custom_call.1} parent=5 // pred_check_branch
        %213 = sbr.rel (%p210) target = $region12
      $region11: #{tpu_custom_call.1} parent=5 // pred_region
        %s214 = ssub.s32 %s18, 1
      $region12: #{tpu_custom_call.1} parent=5 // pred_fallthru
        _
      %p215 = scmp.lt.s32.totalorder %s18, 4
      // Predicated region
      $region13: #{tpu_custom_call.1} parent=5 // pred_check
        %p216 = pneg %p215
      $region14: #{tpu_custom_call.1} parent=5 // pred_check_branch
        %218 = sbr.rel (%p216) target = $region16
      $region15: #{tpu_custom_call.1} parent=5 // pred_region
        // Predicated region
        $region17: #{tpu_custom_call.1} parent=15 // pred_check
          %p219 = pneg %p38
        $region18: #{tpu_custom_call.1} parent=15 // pred_check_branch
          %221 = sbr.rel (%p219) target = $region20
        $region19: #{tpu_custom_call.1} parent=15 // pred_region
          %p222 = scmp.lt.s32.totalorder %s18, 3
          %s223 = scalar_select %p222, %s18, 3
          %s224 = smul.addr %s223, 8
          %s225 = smul.addr %s224, 8
          %s226 = scalar_lea.vmem %s0, %s225
        $region20: #{tpu_custom_call.1} parent=15 // pred_fallthru
          _
        // Predicated region
        $region21: #{tpu_custom_call.1} parent=15 // pred_check
          %p227 = pneg %p64
        $region22: #{tpu_custom_call.1} parent=15 // pred_check_branch
          %229 = sbr.rel (%p227) target = $region24
        $region23: #{tpu_custom_call.1} parent=15 // pred_region
          %p230 = scmp.lt.s32.totalorder %s18, 3
          %s231 = scalar_select %p230, %s18, 3
          %s232 = smul.addr %s231, 8
          %s233 = scalar_lea.vmem %s1, %s232
        $region24: #{tpu_custom_call.1} parent=15 // pred_fallthru
          _
        // Predicated region
        $region25: #{tpu_custom_call.1} parent=15 // pred_check
          %p234 = pneg %p90
        $region26: #{tpu_custom_call.1} parent=15 // pred_check_branch
          %236 = sbr.rel (%p234) target = $region28
        $region27: #{tpu_custom_call.1} parent=15 // pred_region
          %p237 = scmp.lt.s32.totalorder %s18, 3
          %s238 = scalar_select %p237, %s18, 3
          %s239 = smul.addr %s238, 12
          %s240 = smul.addr %s239, 8
          %s241 = scalar_lea.vmem %s2, %s240
        $region28: #{tpu_custom_call.1} parent=15 // pred_fallthru
          _
        // Predicated region
        $region29: #{tpu_custom_call.1} parent=15 // pred_check
          %p242 = pneg %p116
        $region30: #{tpu_custom_call.1} parent=15 // pred_check_branch
          %244 = sbr.rel (%p242) target = $region32
        $region31: #{tpu_custom_call.1} parent=15 // pred_region
          %s245 = sand.u32 %s106, 1
          %s246 = scalar_lea.sflag [#allocation3], %s245
          %s247 = sand.u32 %s106, 1
          %s248 = smul.addr %s247, 384
          %s249 = scalar_lea.vmem [#allocation2], %s248
          %s251 = ssub.s32 6144, 6144
          %252 = vsyncadd %s246, %s251
          %s253 = smul.addr %s18, 48
          %s254 = smul.addr %s253, 128
          %s255 = scalar_lea.hbm %s3, %s254
          %s256 = sshll.u32 %s249, 4
          %s257 = int_to_ptr.vmem [resolvable:$true] %s256
          %262 = dma.hbm_to_vmem [thread:$0]  %s255, 6144, %s257, %s246, 384, 384, 24
        $region32: #{tpu_custom_call.1} parent=15 // pred_fallthru
          _
        // Predicated region
        $region33: #{tpu_custom_call.1} parent=15 // pred_check
          %p263 = pneg %p142
        $region34: #{tpu_custom_call.1} parent=15 // pred_check_branch
          %265 = sbr.rel (%p263) target = $region36
        $region35: #{tpu_custom_call.1} parent=15 // pred_region
          %p266 = scmp.lt.s32.totalorder %s18, 3
          %s267 = scalar_select %p266, %s18, 3
          %s268 = smul.addr %s267, 3
          %s269 = scalar_lea.vmem %s4, %s268
        $region36: #{tpu_custom_call.1} parent=15 // pred_fallthru
          _
        // Predicated region
        $region37: #{tpu_custom_call.1} parent=15 // pred_check
          %p270 = pneg %p168
        $region38: #{tpu_custom_call.1} parent=15 // pred_check_branch
          %272 = sbr.rel (%p270) target = $region40
        $region39: #{tpu_custom_call.1} parent=15 // pred_region
          %p273 = scmp.lt.s32.totalorder %s18, 3
          %s274 = scalar_select %p273, %s18, 3
          %s275 = smul.addr %s274, 3
          %s276 = scalar_lea.vmem %s5, %s275
        $region40: #{tpu_custom_call.1} parent=15 // pred_fallthru
          _
      $region16: #{tpu_custom_call.1} parent=5 // pred_fallthru
        _
      %p277 = scmp.le.s32.totalorder 1, %s18
      %p278 = scmp.lt.s32.totalorder %s18, 5
      %p279 = pnand %p277, %p278
      %p280 = pneg %p279
      // Predicated region
      $region41: #{tpu_custom_call.1} parent=5 // pred_check
        _
      $region42: #{tpu_custom_call.1} parent=5 // pred_check_branch
        %282 = sbr.rel (%p279) target = $region44
      $region43: #{tpu_custom_call.1} parent=5 // pred_region
        %s283 = ssub.s32 %s18, 1
        %s284 = sand.u32 %s109, 1
        %s285 = scalar_lea.sflag [#allocation3], %s284
        %s286 = sand.u32 %s109, 1
        %s287 = smul.addr %s286, 384
        %s288 = scalar_lea.vmem [#allocation2], %s287
        // Predicated region
        $region45: #{tpu_custom_call.1} parent=43 // pred_check
          %p289 = pneg %p122
        $region46: #{tpu_custom_call.1} parent=43 // pred_check_branch
          %291 = sbr.rel (%p289) target = $region48
        $region47: #{tpu_custom_call.1} parent=43 // pred_region
          %292 = dma.done %s285, 6144
        $region48: #{tpu_custom_call.1} parent=43 // pred_fallthru
          _
        %p293 = scmp.lt.s32.totalorder %s23, 3
        %s294 = scalar_select %p293, %s23, 3
        %s295 = smul.addr %s294, 8
        %s296 = smul.addr %s295, 8
        %s297 = scalar_lea.vmem %s0, %s296
        %p298 = pneg %p44
        %p299 = pneg %p41
        %p300 = scmp.lt.s32.totalorder %s23, 3
        %s301 = scalar_select %p300, %s23, 3
        %s302 = smul.addr %s301, 8
        %s303 = scalar_lea.vmem %s1, %s302
        %p304 = pneg %p70
        %p305 = pneg %p67
        %p306 = scmp.lt.s32.totalorder %s23, 3
        %s307 = scalar_select %p306, %s23, 3
        %s308 = smul.addr %s307, 12
        %s309 = smul.addr %s308, 8
        %s310 = scalar_lea.vmem %s2, %s309
        %p311 = pneg %p96
        %p312 = pneg %p93
        %s313 = sand.u32 %s109, 1
        %s314 = scalar_lea.sflag [#allocation3], %s313
        %s315 = sand.u32 %s109, 1
        %s316 = smul.addr %s315, 384
        %s317 = scalar_lea.vmem [#allocation2], %s316
        %p318 = pneg %p122
        %p319 = pneg %p119
        %p320 = scmp.lt.s32.totalorder %s23, 3
        %s321 = scalar_select %p320, %s23, 3
        %s322 = smul.addr %s321, 3
        %s323 = scalar_lea.vmem %s4, %s322
        %p324 = pneg %p148
        %p325 = pneg %p145
        %p326 = scmp.lt.s32.totalorder %s23, 3
        %s327 = scalar_select %p326, %s23, 3
        %s328 = smul.addr %s327, 3
        %s329 = scalar_lea.vmem %s5, %s328
        %p330 = pneg %p174
        %p331 = pneg %p171
        %p332 = pneg %p200
        %p333 = pneg %p197
        %s334 = sand.u32 %s187, 1
        %s335 = scalar_lea.sflag [#allocation4], %s334
        %s336 = sand.u32 %s187, 1
        %s337 = smul.addr %s336, 8
        %s338 = scalar_lea.vmem [#allocation5], %s337
        %p339 = scmp.lt.s32.totalorder %s23, 3
        %s340 = scalar_select %p339, %s23, 3
        %s341 = smul.addr %s340, 8
        %s342 = smul.addr %s341, 8
        %s343 = scalar_lea.vmem %s0, %s342
        %p344 = scmp.lt.s32.totalorder %s23, 3
        %s345 = scalar_select %p344, %s23, 3
        %s346 = smul.addr %s345, 8
        %s347 = scalar_lea.vmem %s1, %s346
        %p348 = scmp.lt.s32.totalorder %s23, 3
        %s349 = scalar_select %p348, %s23, 3
        %s350 = smul.addr %s349, 12
        %s351 = smul.addr %s350, 8
        %s352 = scalar_lea.vmem %s2, %s351
        %p353 = scmp.lt.s32.totalorder %s23, 3
        %s354 = scalar_select %p353, %s23, 3
        %s355 = smul.addr %s354, 3
        %s356 = scalar_lea.vmem %s4, %s355
        %p357 = scmp.lt.s32.totalorder %s23, 3
        %s358 = scalar_select %p357, %s23, 3
        %s359 = smul.addr %s358, 3
        %s360 = scalar_lea.vmem %s5, %s359
        %v361 = vld [vmem:[%s352] sm:$0xff]
        %v362 = vld [vmem:[%s352 + $0x8] sm:$0xff]
        %v363 = vld [vmem:[%s352 + $0x10] sm:$0xff]
        %v364 = vld [vmem:[%s352 + $0x18] sm:$0xff]
        %v365 = vld [vmem:[%s352 + $0x20] sm:$0xff]
        %v366 = vld [vmem:[%s352 + $0x28] sm:$0xff]
        %v367 = vld [vmem:[%s352 + $0x30] sm:$0xff]
        %v368 = vld [vmem:[%s352 + $0x38] sm:$0xff]
        %v369 = vld [vmem:[%s352 + $0x40] sm:$0xff]
        %v370 = vld [vmem:[%s352 + $0x48] sm:$0xff]
        %v371 = vld [vmem:[%s352 + $0x50] sm:$0xff]
        %v372 = vld [vmem:[%s352 + $0x58] sm:$0xff]
        %v373 = vld [vmem:[%s288] sm:$0xff]
        %v374 = vld [vmem:[%s288 + $0x8] sm:$0xff]
        %v375 = vld [vmem:[%s288 + $0x10] sm:$0xff]
        %v376 = vld [vmem:[%s288 + $0x18] sm:$0xff]
        %v377 = vld [vmem:[%s288 + $0x20] sm:$0xff]
        %v378 = vld [vmem:[%s288 + $0x28] sm:$0xff]
        %v379 = vld [vmem:[%s288 + $0x30] sm:$0xff]
        %v380 = vld [vmem:[%s288 + $0x38] sm:$0xff]
        %v381 = vld [vmem:[%s288 + $0x40] sm:$0xff]
        %v382 = vld [vmem:[%s288 + $0x48] sm:$0xff]
        %v383 = vld [vmem:[%s288 + $0x50] sm:$0xff]
        %v384 = vld [vmem:[%s288 + $0x58] sm:$0xff]
        %v385 = vld [vmem:[%s288 + $0x60] sm:$0xff]
        %v386 = vld [vmem:[%s288 + $0x68] sm:$0xff]
        %v387 = vld [vmem:[%s288 + $0x70] sm:$0xff]
        %v388 = vld [vmem:[%s288 + $0x78] sm:$0xff]
        %v389 = vld [vmem:[%s288 + $0x80] sm:$0xff]
        %v390 = vld [vmem:[%s288 + $0x88] sm:$0xff]
        %v391 = vld [vmem:[%s288 + $0x90] sm:$0xff]
        %v392 = vld [vmem:[%s288 + $0x98] sm:$0xff]
        %v393 = vld [vmem:[%s288 + $0xa0] sm:$0xff]
        %v394 = vld [vmem:[%s288 + $0xa8] sm:$0xff]
        %v395 = vld [vmem:[%s288 + $0xb0] sm:$0xff]
        %v396 = vld [vmem:[%s288 + $0xb8] sm:$0xff]
        %v397 = vld [vmem:[%s288 + $0xc0] sm:$0xff]
        %v398 = vld [vmem:[%s288 + $0xc8] sm:$0xff]
        %v399 = vld [vmem:[%s288 + $0xd0] sm:$0xff]
        %v400 = vld [vmem:[%s288 + $0xd8] sm:$0xff]
        %v401 = vld [vmem:[%s288 + $0xe0] sm:$0xff]
        %v402 = vld [vmem:[%s288 + $0xe8] sm:$0xff]
        %v403 = vld [vmem:[%s288 + $0xf0] sm:$0xff]
        %v404 = vld [vmem:[%s288 + $0xf8] sm:$0xff]
        %v405 = vld [vmem:[%s288 + $0x100] sm:$0xff]
        %v406 = vld [vmem:[%s288 + $0x108] sm:$0xff]
        %v407 = vld [vmem:[%s288 + $0x110] sm:$0xff]
        %v408 = vld [vmem:[%s288 + $0x118] sm:$0xff]
        %v409 = vld [vmem:[%s288 + $0x120] sm:$0xff]
        %v410 = vld [vmem:[%s288 + $0x128] sm:$0xff]
        %v411 = vld [vmem:[%s288 + $0x130] sm:$0xff]
        %v412 = vld [vmem:[%s288 + $0x138] sm:$0xff]
        %v413 = vld [vmem:[%s288 + $0x140] sm:$0xff]
        %v414 = vld [vmem:[%s288 + $0x148] sm:$0xff]
        %v415 = vld [vmem:[%s288 + $0x150] sm:$0xff]
        %v416 = vld [vmem:[%s288 + $0x158] sm:$0xff]
        %v417 = vld [vmem:[%s288 + $0x160] sm:$0xff]
        %v418 = vld [vmem:[%s288 + $0x168] sm:$0xff]
        %v419 = vld [vmem:[%s288 + $0x170] sm:$0xff]
        %v420 = vld [vmem:[%s288 + $0x178] sm:$0xff]
        %v421 = vld [vmem:[%s356] sm:$0x7]
        %v422 = vld [vmem:[%s360] sm:$0x7]
        %v423 = vld [vmem:[%s347] sm:$0xff]
        %v424 = vld [vmem:[%s343] sm:$0xff]
        %v425 = vld [vmem:[%s343 + $0x8] sm:$0xff]
        %v426 = vld [vmem:[%s343 + $0x10] sm:$0xff]
        %v427 = vld [vmem:[%s343 + $0x18] sm:$0xff]
        %v428 = vld [vmem:[%s343 + $0x20] sm:$0xff]
        %v429 = vld [vmem:[%s343 + $0x28] sm:$0xff]
        %v430 = vld [vmem:[%s343 + $0x30] sm:$0xff]
        %v431 = vld [vmem:[%s343 + $0x38] sm:$0xff]
        %v433 = vlaneseq
        %v434 = vshrl.u32 %v433, 7
        %v435 = vsub.s32 0, %v434
        %v436 = vrot.slane %v421, %v435
        %v437 = vlaneseq
        %v438 = vshrl.u32 %v437, 7
        %v439 = vsub.s32 1, %v438
        %v440 = vrot.slane %v421, %v439
        %v441 = vlaneseq
        %v442 = vshrl.u32 %v441, 7
        %v443 = vsub.s32 2, %v442
        %v444 = vrot.slane %v421, %v443
        %vm448 = vcmask 261120
        %v450 = vsel %vm448, %v424, 0
        %v453 = vsel %vm448, %v425, 0
        %v456 = vsel %vm448, %v426, 0
        %v459 = vsel %vm448, %v427, 0
        %v462 = vsel %vm448, %v428, 0
        %v465 = vsel %vm448, %v429, 0
        %v468 = vsel %vm448, %v430, 0
        %v471 = vsel %vm448, %v431, 0
        %473 = vmatprep.subr.mxu0 %v362
        %474 = vmatpush1.msra.mxu0 %v361
        %475 = vmatprep.subr.mxu0 %v365
        %476 = vmatpush1.msra.mxu0 %v364
        %477 = vmatprep.subr.mxu0 %v368
        %478 = vmatpush1.msra.mxu0 %v367
        %479 = vmatprep.subr.mxu0 %v371
        %480 = vmatpush1.msra.mxu0 %v370
        %481 = vmatprep.subr.mxu0 0.0
        %482 = vmatpush1.msra.mxu0 0.0
        %483 = vmatprep.subr.mxu0 0.0
        %484 = vmatpush1.msra.mxu0 0.0
        %485 = vmatprep.subr.mxu0 0.0
        %486 = vmatpush1.msra.mxu0 0.0
        %487 = vmatprep.subr.mxu0 0.0
        %488 = vmatpush1.msra.mxu0 0.0
        %489 = vmatprep.subr.mxu0 0.0
        %490 = vmatpush1.msra.mxu0 0.0
        %491 = vmatprep.subr.mxu0 0.0
        %492 = vmatpush1.msra.mxu0 0.0
        %493 = vmatprep.subr.mxu0 0.0
        %494 = vmatpush1.msra.mxu0 0.0
        %495 = vmatprep.subr.mxu0 0.0
        %496 = vmatpush1.msra.mxu0 0.0
        %497 = vmatprep.subr.mxu0 0.0
        %498 = vmatpush1.msra.mxu0 0.0
        %499 = vmatprep.subr.mxu0 0.0
        %500 = vmatpush1.msra.mxu0 0.0
        %501 = vmatprep.subr.mxu0 0.0
        %502 = vmatpush1.msra.mxu0 0.0
        %503 = vmatprep.subr.mxu0 0.0
        %504 = vmatpush1.msra.mxu0 0.0
        %505 = vmatprep.subr.mxu0 0.0
        %506 = vmatpush1.msra.mxu0 0.0
        %507 = vmatprep.subr.mxu0 0.0
        %508 = vmatpush1.msra.mxu0 0.0
        %509 = vmatprep.subr.mxu0 0.0
        %510 = vmatpush1.msra.mxu0 0.0
        %511 = vmatprep.subr.mxu0 0.0
        %512 = vmatpush1.msra.mxu0 0.0
        %513 = vmatprep.subr.mxu0 0.0
        %514 = vmatpush1.msra.mxu0 0.0
        %515 = vmatprep.subr.mxu0 0.0
        %516 = vmatpush1.msra.mxu0 0.0
        %517 = vmatprep.subr.mxu0 0.0
        %518 = vmatpush1.msra.mxu0 0.0
        %519 = vmatprep.subr.mxu0 0.0
        %520 = vmatpush1.msra.mxu0 0.0
        %521 = vmatprep.subr.mxu0 0.0
        %522 = vmatpush1.msra.mxu0 0.0
        %523 = vmatprep.subr.mxu0 0.0
        %524 = vmatpush1.msra.mxu0 0.0
        %525 = vmatprep.subr.mxu0 0.0
        %526 = vmatpush1.msra.mxu0 0.0
        %527 = vmatprep.subr.mxu0 0.0
        %528 = vmatpush1.msra.mxu0 0.0
        %529 = vmatprep.subr.mxu0 0.0
        %530 = vmatpush1.msra.mxu0 0.0
        %531 = vmatprep.subr.mxu0 0.0
        %532 = vmatpush1.msra.mxu0 0.0
        %533 = vmatprep.subr.mxu0 0.0
        %534 = vmatpush1.msra.mxu0 0.0
        %535 = vmatprep.subr.mxu0 0.0
        %536 = vmatpush1.msra.mxu0 0.0
        %537 = vmatprep.mubr.f32.mxu0 0.0
        %538 = vmatmul.mubr.f32.gmra.mrb[0].mxu0 %v450
        %v539 = vpop.f32.mrb[0].mxu0
        %v540 = vadd.f32 %v436, %v539
        %v541 = vpop.f32.mrb[0].mxu0
        %v542 = vadd.f32 %v440, %v541
        %543 = vmatprep.mubr.f32.mxu0 0.0
        %544 = vmatmul.mubr.f32.gmra.mrb[0].mxu0 %v453
        %v545 = vpop.f32.mrb[0].mxu0
        %v546 = vadd.f32 %v436, %v545
        %v547 = vpop.f32.mrb[0].mxu0
        %v548 = vadd.f32 %v440, %v547
        %549 = vmatprep.mubr.f32.mxu0 0.0
        %550 = vmatmul.mubr.f32.gmra.mrb[0].mxu0 %v456
        %v551 = vpop.f32.mrb[0].mxu0
        %v552 = vadd.f32 %v436, %v551
        %v553 = vpop.f32.mrb[0].mxu0
        %v554 = vadd.f32 %v440, %v553
        %555 = vmatprep.mubr.f32.mxu0 0.0
        %556 = vmatmul.mubr.f32.gmra.mrb[0].mxu0 %v459
        %v557 = vpop.f32.mrb[0].mxu0
        %v558 = vadd.f32 %v436, %v557
        %v559 = vpop.f32.mrb[0].mxu0
        %v560 = vadd.f32 %v440, %v559
        %561 = vmatprep.mubr.f32.mxu0 0.0
        %562 = vmatmul.mubr.f32.gmra.mrb[0].mxu0 %v462
        %v563 = vpop.f32.mrb[0].mxu0
        %v564 = vadd.f32 %v436, %v563
        %v565 = vpop.f32.mrb[0].mxu0
        %v566 = vadd.f32 %v440, %v565
        %567 = vmatprep.mubr.f32.mxu0 0.0
        %568 = vmatmul.mubr.f32.gmra.mrb[0].mxu0 %v465
        %v569 = vpop.f32.mrb[0].mxu0
        %v570 = vadd.f32 %v436, %v569
        %v571 = vpop.f32.mrb[0].mxu0
        %v572 = vadd.f32 %v440, %v571
        %573 = vmatprep.mubr.f32.mxu0 0.0
        %574 = vmatmul.mubr.f32.gmra.mrb[0].mxu0 %v468
        %v575 = vpop.f32.mrb[0].mxu0
        %v576 = vadd.f32 %v436, %v575
        %v577 = vpop.f32.mrb[0].mxu0
        %v578 = vadd.f32 %v440, %v577
        %579 = vmatprep.mubr.f32.mxu0 0.0
        %580 = vmatmul.mubr.f32.gmra.mrb[0].mxu0 %v471
        %v581 = vpop.f32.mrb[0].mxu0
        %v582 = vadd.f32 %v436, %v581
        %v583 = vpop.f32.mrb[0].mxu0
        %v584 = vadd.f32 %v440, %v583
        %585 = vdwg.mxu0
        %586 = vmatprep.subr.mxu0 0.0
        %587 = vmatpush1.msra.mxu0 %v363
        %588 = vmatprep.subr.mxu0 0.0
        %589 = vmatpush1.msra.mxu0 %v366
        %590 = vmatprep.subr.mxu0 0.0
        %591 = vmatpush1.msra.mxu0 %v369
        %592 = vmatprep.subr.mxu0 0.0
        %593 = vmatpush1.msra.mxu0 %v372
        %594 = vmatprep.subr.mxu0 0.0
        %595 = vmatpush1.msra.mxu0 0.0
        %596 = vmatprep.subr.mxu0 0.0
        %597 = vmatpush1.msra.mxu0 0.0
        %598 = vmatprep.subr.mxu0 0.0
        %599 = vmatpush1.msra.mxu0 0.0
        %600 = vmatprep.subr.mxu0 0.0
        %601 = vmatpush1.msra.mxu0 0.0
        %602 = vmatprep.subr.mxu0 0.0
        %603 = vmatpush1.msra.mxu0 0.0
        %604 = vmatprep.subr.mxu0 0.0
        %605 = vmatpush1.msra.mxu0 0.0
        %606 = vmatprep.subr.mxu0 0.0
        %607 = vmatpush1.msra.mxu0 0.0
        %608 = vmatprep.subr.mxu0 0.0
        %609 = vmatpush1.msra.mxu0 0.0
        %610 = vmatprep.subr.mxu0 0.0
        %611 = vmatpush1.msra.mxu0 0.0
        %612 = vmatprep.subr.mxu0 0.0
        %613 = vmatpush1.msra.mxu0 0.0
        %614 = vmatprep.subr.mxu0 0.0
        %615 = vmatpush1.msra.mxu0 0.0
        %616 = vmatprep.subr.mxu0 0.0
        %617 = vmatpush1.msra.mxu0 0.0
        %618 = vmatprep.subr.mxu0 0.0
        %619 = vmatpush1.msra.mxu0 0.0
        %620 = vmatprep.subr.mxu0 0.0
        %621 = vmatpush1.msra.mxu0 0.0
        %622 = vmatprep.subr.mxu0 0.0
        %623 = vmatpush1.msra.mxu0 0.0
        %624 = vmatprep.subr.mxu0 0.0
        %625 = vmatpush1.msra.mxu0 0.0
        %626 = vmatprep.subr.mxu0 0.0
        %627 = vmatpush1.msra.mxu0 0.0
        %628 = vmatprep.subr.mxu0 0.0
        %629 = vmatpush1.msra.mxu0 0.0
        %630 = vmatprep.subr.mxu0 0.0
        %631 = vmatpush1.msra.mxu0 0.0
        %632 = vmatprep.subr.mxu0 0.0
        %633 = vmatpush1.msra.mxu0 0.0
        %634 = vmatprep.subr.mxu0 0.0
        %635 = vmatpush1.msra.mxu0 0.0
        %636 = vmatprep.subr.mxu0 0.0
        %637 = vmatpush1.msra.mxu0 0.0
        %638 = vmatprep.subr.mxu0 0.0
        %639 = vmatpush1.msra.mxu0 0.0
        %640 = vmatprep.subr.mxu0 0.0
        %641 = vmatpush1.msra.mxu0 0.0
        %642 = vmatprep.subr.mxu0 0.0
        %643 = vmatpush1.msra.mxu0 0.0
        %644 = vmatprep.subr.mxu0 0.0
        %645 = vmatpush1.msra.mxu0 0.0
        %646 = vmatprep.subr.mxu0 0.0
        %647 = vmatpush1.msra.mxu0 0.0
        %648 = vmatprep.subr.mxu0 0.0
        %649 = vmatpush1.msra.mxu0 0.0
        %650 = vmatprep.mubr.f32.mxu0 0.0
        %651 = vmatmul.mubr.f32.gmra.mrb[0].mxu0 %v450
        %v652 = vpop.f32.mrb[0].mxu0
        %v653 = vadd.f32 %v444, %v652
        %v654 = vpop.f32.mrb[0].mxu0
        %655 = vmatprep.mubr.f32.mxu0 0.0
        %656 = vmatmul.mubr.f32.gmra.mrb[0].mxu0 %v453
        %v657 = vpop.f32.mrb[0].mxu0
        %v658 = vadd.f32 %v444, %v657
        %v659 = vpop.f32.mrb[0].mxu0
        %660 = vmatprep.mubr.f32.mxu0 0.0
        %661 = vmatmul.mubr.f32.gmra.mrb[0].mxu0 %v456
        %v662 = vpop.f32.mrb[0].mxu0
        %v663 = vadd.f32 %v444, %v662
        %v664 = vpop.f32.mrb[0].mxu0
        %665 = vmatprep.mubr.f32.mxu0 0.0
        %666 = vmatmul.mubr.f32.gmra.mrb[0].mxu0 %v459
        %v667 = vpop.f32.mrb[0].mxu0
        %v668 = vadd.f32 %v444, %v667
        %v669 = vpop.f32.mrb[0].mxu0
        %670 = vmatprep.mubr.f32.mxu0 0.0
        %671 = vmatmul.mubr.f32.gmra.mrb[0].mxu0 %v462
        %v672 = vpop.f32.mrb[0].mxu0
        %v673 = vadd.f32 %v444, %v672
        %v674 = vpop.f32.mrb[0].mxu0
        %675 = vmatprep.mubr.f32.mxu0 0.0
        %676 = vmatmul.mubr.f32.gmra.mrb[0].mxu0 %v465
        %v677 = vpop.f32.mrb[0].mxu0
        %v678 = vadd.f32 %v444, %v677
        %v679 = vpop.f32.mrb[0].mxu0
        %680 = vmatprep.mubr.f32.mxu0 0.0
        %681 = vmatmul.mubr.f32.gmra.mrb[0].mxu0 %v468
        %v682 = vpop.f32.mrb[0].mxu0
        %v683 = vadd.f32 %v444, %v682
        %v684 = vpop.f32.mrb[0].mxu0
        %685 = vmatprep.mubr.f32.mxu0 0.0
        %686 = vmatmul.mubr.f32.gmra.mrb[0].mxu0 %v471
        %v687 = vpop.f32.mrb[0].mxu0
        %v688 = vadd.f32 %v444, %v687
        %v689 = vpop.f32.mrb[0].mxu0
        %690 = vdwg.mxu0
        %v692 = vlaneseq
        %v693 = vshrl.u32 %v692, 7
        %v694 = vsub.s32 0, %v693
        %v695 = vrot.slane %v422, %v694
        %v696 = vlaneseq
        %v697 = vshrl.u32 %v696, 7
        %v698 = vsub.s32 1, %v697
        %v699 = vrot.slane %v422, %v698
        %v700 = vlaneseq
        %v701 = vshrl.u32 %v700, 7
        %v702 = vsub.s32 2, %v701
        %v703 = vrot.slane %v422, %v702
        %707 = vmatprep.subr.mxu0 %v374
        %708 = vmatpush1.msra.mxu0 %v373
        %709 = vmatprep.subr.mxu0 %v377
        %710 = vmatpush1.msra.mxu0 %v376
        %711 = vmatprep.subr.mxu0 %v380
        %712 = vmatpush1.msra.mxu0 %v379
        %713 = vmatprep.subr.mxu0 %v383
        %714 = vmatpush1.msra.mxu0 %v382
        %715 = vmatprep.subr.mxu0 %v386
        %716 = vmatpush1.msra.mxu0 %v385
        %717 = vmatprep.subr.mxu0 %v389
        %718 = vmatpush1.msra.mxu0 %v388
        %719 = vmatprep.subr.mxu0 %v392
        %720 = vmatpush1.msra.mxu0 %v391
        %721 = vmatprep.subr.mxu0 %v395
        %722 = vmatpush1.msra.mxu0 %v394
        %723 = vmatprep.subr.mxu0 %v398
        %724 = vmatpush1.msra.mxu0 %v397
        %725 = vmatprep.subr.mxu0 %v401
        %726 = vmatpush1.msra.mxu0 %v400
        %727 = vmatprep.subr.mxu0 %v404
        %728 = vmatpush1.msra.mxu0 %v403
        %729 = vmatprep.subr.mxu0 %v407
        %730 = vmatpush1.msra.mxu0 %v406
        %731 = vmatprep.subr.mxu0 %v410
        %732 = vmatpush1.msra.mxu0 %v409
        %733 = vmatprep.subr.mxu0 %v413
        %734 = vmatpush1.msra.mxu0 %v412
        %735 = vmatprep.subr.mxu0 %v416
        %736 = vmatpush1.msra.mxu0 %v415
        %737 = vmatprep.subr.mxu0 %v419
        %738 = vmatpush1.msra.mxu0 %v418
        %739 = vmatprep.subr.mxu0 0.0
        %740 = vmatpush1.msra.mxu0 0.0
        %741 = vmatprep.subr.mxu0 0.0
        %742 = vmatpush1.msra.mxu0 0.0
        %743 = vmatprep.subr.mxu0 0.0
        %744 = vmatpush1.msra.mxu0 0.0
        %745 = vmatprep.subr.mxu0 0.0
        %746 = vmatpush1.msra.mxu0 0.0
        %747 = vmatprep.subr.mxu0 0.0
        %748 = vmatpush1.msra.mxu0 0.0
        %749 = vmatprep.subr.mxu0 0.0
        %750 = vmatpush1.msra.mxu0 0.0
        %751 = vmatprep.subr.mxu0 0.0
        %752 = vmatpush1.msra.mxu0 0.0
        %753 = vmatprep.subr.mxu0 0.0
        %754 = vmatpush1.msra.mxu0 0.0
        %755 = vmatprep.subr.mxu0 0.0
        %756 = vmatpush1.msra.mxu0 0.0
        %757 = vmatprep.subr.mxu0 0.0
        %758 = vmatpush1.msra.mxu0 0.0
        %759 = vmatprep.subr.mxu0 0.0
        %760 = vmatpush1.msra.mxu0 0.0
        %761 = vmatprep.subr.mxu0 0.0
        %762 = vmatpush1.msra.mxu0 0.0
        %763 = vmatprep.subr.mxu0 0.0
        %764 = vmatpush1.msra.mxu0 0.0
        %765 = vmatprep.subr.mxu0 0.0
        %766 = vmatpush1.msra.mxu0 0.0
        %767 = vmatprep.subr.mxu0 0.0
        %768 = vmatpush1.msra.mxu0 0.0
        %769 = vmatprep.subr.mxu0 0.0
        %770 = vmatpush1.msra.mxu0 0.0
        %771 = vmatprep.mubr.f32.mxu0 0.0
        %772 = vmatmul.mubr.f32.gmra.mrb[0].mxu0 0.0
        %v773 = vpop.f32.mrb[0].mxu0
        %v774 = vadd.f32 %v695, %v773
        %v775 = vpop.f32.mrb[0].mxu0
        %v776 = vadd.f32 %v699, %v775
        %777 = vdwg.mxu0
        %778 = vmatprep.subr.mxu0 0.0
        %779 = vmatpush1.msra.mxu0 %v375
        %780 = vmatprep.subr.mxu0 0.0
        %781 = vmatpush1.msra.mxu0 %v378
        %782 = vmatprep.subr.mxu0 0.0
        %783 = vmatpush1.msra.mxu0 %v381
        %784 = vmatprep.subr.mxu0 0.0
        %785 = vmatpush1.msra.mxu0 %v384
        %786 = vmatprep.subr.mxu0 0.0
        %787 = vmatpush1.msra.mxu0 %v387
        %788 = vmatprep.subr.mxu0 0.0
        %789 = vmatpush1.msra.mxu0 %v390
        %790 = vmatprep.subr.mxu0 0.0
        %791 = vmatpush1.msra.mxu0 %v393
        %792 = vmatprep.subr.mxu0 0.0
        %793 = vmatpush1.msra.mxu0 %v396
        %794 = vmatprep.subr.mxu0 0.0
        %795 = vmatpush1.msra.mxu0 %v399
        %796 = vmatprep.subr.mxu0 0.0
        %797 = vmatpush1.msra.mxu0 %v402
        %798 = vmatprep.subr.mxu0 0.0
        %799 = vmatpush1.msra.mxu0 %v405
        %800 = vmatprep.subr.mxu0 0.0
        %801 = vmatpush1.msra.mxu0 %v408
        %802 = vmatprep.subr.mxu0 0.0
        %803 = vmatpush1.msra.mxu0 %v411
        %804 = vmatprep.subr.mxu0 0.0
        %805 = vmatpush1.msra.mxu0 %v414
        %806 = vmatprep.subr.mxu0 0.0
        %807 = vmatpush1.msra.mxu0 %v417
        %808 = vmatprep.subr.mxu0 0.0
        %809 = vmatpush1.msra.mxu0 %v420
        %810 = vmatprep.subr.mxu0 0.0
        %811 = vmatpush1.msra.mxu0 0.0
        %812 = vmatprep.subr.mxu0 0.0
        %813 = vmatpush1.msra.mxu0 0.0
        %814 = vmatprep.subr.mxu0 0.0
        %815 = vmatpush1.msra.mxu0 0.0
        %816 = vmatprep.subr.mxu0 0.0
        %817 = vmatpush1.msra.mxu0 0.0
        %818 = vmatprep.subr.mxu0 0.0
        %819 = vmatpush1.msra.mxu0 0.0
        %820 = vmatprep.subr.mxu0 0.0
        %821 = vmatpush1.msra.mxu0 0.0
        %822 = vmatprep.subr.mxu0 0.0
        %823 = vmatpush1.msra.mxu0 0.0
        %824 = vmatprep.subr.mxu0 0.0
        %825 = vmatpush1.msra.mxu0 0.0
        %826 = vmatprep.subr.mxu0 0.0
        %827 = vmatpush1.msra.mxu0 0.0
        %828 = vmatprep.subr.mxu0 0.0
        %829 = vmatpush1.msra.mxu0 0.0
        %830 = vmatprep.subr.mxu0 0.0
        %831 = vmatpush1.msra.mxu0 0.0
        %832 = vmatprep.subr.mxu0 0.0
        %833 = vmatpush1.msra.mxu0 0.0
        %834 = vmatprep.subr.mxu0 0.0
        %835 = vmatpush1.msra.mxu0 0.0
        %836 = vmatprep.subr.mxu0 0.0
        %837 = vmatpush1.msra.mxu0 0.0
        %838 = vmatprep.subr.mxu0 0.0
        %839 = vmatpush1.msra.mxu0 0.0
        %840 = vmatprep.subr.mxu0 0.0
        %841 = vmatpush1.msra.mxu0 0.0
        %842 = vmatprep.mubr.f32.mxu0 0.0
        %843 = vmatmul.mubr.f32.gmra.mrb[0].mxu0 0.0
        %v844 = vpop.f32.mrb[0].mxu0
        %v845 = vadd.f32 %v703, %v844
        %v846 = vpop.f32.mrb[0].mxu0
        %847 = vdwg.mxu0
        %v848 = vadd.f32 %v540, %v774
        %v849 = vxor.u32 %v848, 2147483648
        %v850 = vmul.f32 %v849, 1.442695
        %v851 = vpow.pop %v850
        %v852 = vadd.f32 %v851, 1.0
        %v853 = vrcp.pop %v852
        %v854 = vmul.f32 1.0, %v853
        %v855 = vadd.f32 %v542, %v776
        %v856 = vxor.u32 %v855, 2147483648
        %v857 = vmul.f32 %v856, 1.442695
        %v858 = vpow.pop %v857
        %v859 = vadd.f32 %v858, 1.0
        %v860 = vrcp.pop %v859
        %v861 = vmul.f32 1.0, %v860
        %v862 = vmul.f32 %v854, %v845
        %v863 = vadd.f32 %v653, %v862
        %v864 = vtanh.pop %v863
        %v865 = vsub.f32 1.0, %v861
        %v866 = vmul.f32 %v865, %v864
        %v867 = vmul.f32 %v861, 0.0
        %v868 = vadd.f32 %v866, %v867
        %vm869 = vcmp.gt.s32.totalorder %v423, 0
        %v870 = vsel %vm869, 1, 0
        %871 = vset.pattern.permute.xlu0 0
        %872 = vperm.xlu0 %871, %v870
        %v873 = vpop.permute.xlu0 %872
        %vm874 = vcmp.eq.s32.totalorder %v873, 1
        %v875 = vsel %vm874, %v868, 0.0
        %876 = vmatprep.subr.mxu0 %v374
        %877 = vmatpush1.msra.mxu0 %v373
        %878 = vmatprep.subr.mxu0 %v377
        %879 = vmatpush1.msra.mxu0 %v376
        %880 = vmatprep.subr.mxu0 %v380
        %881 = vmatpush1.msra.mxu0 %v379
        %882 = vmatprep.subr.mxu0 %v383
        %883 = vmatpush1.msra.mxu0 %v382
        %884 = vmatprep.subr.mxu0 %v386
        %885 = vmatpush1.msra.mxu0 %v385
        %886 = vmatprep.subr.mxu0 %v389
        %887 = vmatpush1.msra.mxu0 %v388
        %888 = vmatprep.subr.mxu0 %v392
        %889 = vmatpush1.msra.mxu0 %v391
        %890 = vmatprep.subr.mxu0 %v395
        %891 = vmatpush1.msra.mxu0 %v394
        %892 = vmatprep.subr.mxu0 %v398
        %893 = vmatpush1.msra.mxu0 %v397
        %894 = vmatprep.subr.mxu0 %v401
        %895 = vmatpush1.msra.mxu0 %v400
        %896 = vmatprep.subr.mxu0 %v404
        %897 = vmatpush1.msra.mxu0 %v403
        %898 = vmatprep.subr.mxu0 %v407
        %899 = vmatpush1.msra.mxu0 %v406
        %900 = vmatprep.subr.mxu0 %v410
        %901 = vmatpush1.msra.mxu0 %v409
        %902 = vmatprep.subr.mxu0 %v413
        %903 = vmatpush1.msra.mxu0 %v412
        %904 = vmatprep.subr.mxu0 %v416
        %905 = vmatpush1.msra.mxu0 %v415
        %906 = vmatprep.subr.mxu0 %v419
        %907 = vmatpush1.msra.mxu0 %v418
        %908 = vmatprep.subr.mxu0 0.0
        %909 = vmatpush1.msra.mxu0 0.0
        %910 = vmatprep.subr.mxu0 0.0
        %911 = vmatpush1.msra.mxu0 0.0
        %912 = vmatprep.subr.mxu0 0.0
        %913 = vmatpush1.msra.mxu0 0.0
        %914 = vmatprep.subr.mxu0 0.0
        %915 = vmatpush1.msra.mxu0 0.0
        %916 = vmatprep.subr.mxu0 0.0
        %917 = vmatpush1.msra.mxu0 0.0
        %918 = vmatprep.subr.mxu0 0.0
        %919 = vmatpush1.msra.mxu0 0.0
        %920 = vmatprep.subr.mxu0 0.0
        %921 = vmatpush1.msra.mxu0 0.0
        %922 = vmatprep.subr.mxu0 0.0
        %923 = vmatpush1.msra.mxu0 0.0
        %924 = vmatprep.subr.mxu0 0.0
        %925 = vmatpush1.msra.mxu0 0.0
        %926 = vmatprep.subr.mxu0 0.0
        %927 = vmatpush1.msra.mxu0 0.0
        %928 = vmatprep.subr.mxu0 0.0
        %929 = vmatpush1.msra.mxu0 0.0
        %930 = vmatprep.subr.mxu0 0.0
        %931 = vmatpush1.msra.mxu0 0.0
        %932 = vmatprep.subr.mxu0 0.0
        %933 = vmatpush1.msra.mxu0 0.0
        %934 = vmatprep.subr.mxu0 0.0
        %935 = vmatpush1.msra.mxu0 0.0
        %936 = vmatprep.subr.mxu0 0.0
        %937 = vmatpush1.msra.mxu0 0.0
        %938 = vmatprep.subr.mxu0 0.0
        %939 = vmatpush1.msra.mxu0 0.0
        %940 = vmatprep.mubr.f32.mxu0 0.0
        %941 = vmatmul.mubr.f32.gmra.mrb[0].mxu0 %v875
        %v942 = vpop.f32.mrb[0].mxu0
        %v943 = vadd.f32 %v695, %v942
        %v944 = vpop.f32.mrb[0].mxu0
        %v945 = vadd.f32 %v699, %v944
        %946 = vdwg.mxu0
        %947 = vmatprep.subr.mxu0 0.0
        %948 = vmatpush1.msra.mxu0 %v375
        %949 = vmatprep.subr.mxu0 0.0
        %950 = vmatpush1.msra.mxu0 %v378
        %951 = vmatprep.subr.mxu0 0.0
        %952 = vmatpush1.msra.mxu0 %v381
        %953 = vmatprep.subr.mxu0 0.0
        %954 = vmatpush1.msra.mxu0 %v384
        %955 = vmatprep.subr.mxu0 0.0
        %956 = vmatpush1.msra.mxu0 %v387
        %957 = vmatprep.subr.mxu0 0.0
        %958 = vmatpush1.msra.mxu0 %v390
        %959 = vmatprep.subr.mxu0 0.0
        %960 = vmatpush1.msra.mxu0 %v393
        %961 = vmatprep.subr.mxu0 0.0
        %962 = vmatpush1.msra.mxu0 %v396
        %963 = vmatprep.subr.mxu0 0.0
        %964 = vmatpush1.msra.mxu0 %v399
        %965 = vmatprep.subr.mxu0 0.0
        %966 = vmatpush1.msra.mxu0 %v402
        %967 = vmatprep.subr.mxu0 0.0
        %968 = vmatpush1.msra.mxu0 %v405
        %969 = vmatprep.subr.mxu0 0.0
        %970 = vmatpush1.msra.mxu0 %v408
        %971 = vmatprep.subr.mxu0 0.0
        %972 = vmatpush1.msra.mxu0 %v411
        %973 = vmatprep.subr.mxu0 0.0
        %974 = vmatpush1.msra.mxu0 %v414
        %975 = vmatprep.subr.mxu0 0.0
        %976 = vmatpush1.msra.mxu0 %v417
        %977 = vmatprep.subr.mxu0 0.0
        %978 = vmatpush1.msra.mxu0 %v420
        %979 = vmatprep.subr.mxu0 0.0
        %980 = vmatpush1.msra.mxu0 0.0
        %981 = vmatprep.subr.mxu0 0.0
        %982 = vmatpush1.msra.mxu0 0.0
        %983 = vmatprep.subr.mxu0 0.0
        %984 = vmatpush1.msra.mxu0 0.0
        %985 = vmatprep.subr.mxu0 0.0
        %986 = vmatpush1.msra.mxu0 0.0
        %987 = vmatprep.subr.mxu0 0.0
        %988 = vmatpush1.msra.mxu0 0.0
        %989 = vmatprep.subr.mxu0 0.0
        %990 = vmatpush1.msra.mxu0 0.0
        %991 = vmatprep.subr.mxu0 0.0
        %992 = vmatpush1.msra.mxu0 0.0
        %993 = vmatprep.subr.mxu0 0.0
        %994 = vmatpush1.msra.mxu0 0.0
        %995 = vmatprep.subr.mxu0 0.0
        %996 = vmatpush1.msra.mxu0 0.0
        %997 = vmatprep.subr.mxu0 0.0
        %998 = vmatpush1.msra.mxu0 0.0
        %999 = vmatprep.subr.mxu0 0.0
        %1000 = vmatpush1.msra.mxu0 0.0
        %1001 = vmatprep.subr.mxu0 0.0
        %1002 = vmatpush1.msra.mxu0 0.0
        %1003 = vmatprep.subr.mxu0 0.0
        %1004 = vmatpush1.msra.mxu0 0.0
        %1005 = vmatprep.subr.mxu0 0.0
        %1006 = vmatpush1.msra.mxu0 0.0
        %1007 = vmatprep.subr.mxu0 0.0
        %1008 = vmatpush1.msra.mxu0 0.0
        %1009 = vmatprep.subr.mxu0 0.0
        %1010 = vmatpush1.msra.mxu0 0.0
        %1011 = vmatprep.mubr.f32.mxu0 0.0
        %1012 = vmatmul.mubr.f32.gmra.mrb[0].mxu0 %v875
        %v1013 = vpop.f32.mrb[0].mxu0
        %v1014 = vadd.f32 %v703, %v1013
        %v1015 = vpop.f32.mrb[0].mxu0
        %1016 = vdwg.mxu0
        %v1017 = vadd.f32 %v546, %v943
        %v1018 = vxor.u32 %v1017, 2147483648
        %v1019 = vmul.f32 %v1018, 1.442695
        %v1020 = vpow.pop %v1019
        %v1021 = vadd.f32 %v1020, 1.0
        %v1022 = vrcp.pop %v1021
        %v1023 = vmul.f32 1.0, %v1022
        %v1024 = vadd.f32 %v548, %v945
        %v1025 = vxor.u32 %v1024, 2147483648
        %v1026 = vmul.f32 %v1025, 1.442695
        %v1027 = vpow.pop %v1026
        %v1028 = vadd.f32 %v1027, 1.0
        %v1029 = vrcp.pop %v1028
        %v1030 = vmul.f32 1.0, %v1029
        %v1031 = vmul.f32 %v1023, %v1014
        %v1032 = vadd.f32 %v658, %v1031
        %v1033 = vtanh.pop %v1032
        %v1034 = vsub.f32 1.0, %v1030
        %v1035 = vmul.f32 %v1034, %v1033
        %v1036 = vmul.f32 %v1030, %v875
        %v1037 = vadd.f32 %v1035, %v1036
        %vm1038 = vcmp.gt.s32.totalorder %v423, 1
        %v1039 = vsel %vm1038, 1, 0
        %1040 = vset.pattern.permute.xlu0 0
        %1041 = vperm.xlu0 %1040, %v1039
        %v1042 = vpop.permute.xlu0 %1041
        %vm1043 = vcmp.eq.s32.totalorder %v1042, 1
        %v1044 = vsel %vm1043, %v1037, %v875
        %1045 = vmatprep.subr.mxu0 %v374
        %1046 = vmatpush1.msra.mxu0 %v373
        %1047 = vmatprep.subr.mxu0 %v377
        %1048 = vmatpush1.msra.mxu0 %v376
        %1049 = vmatprep.subr.mxu0 %v380
        %1050 = vmatpush1.msra.mxu0 %v379
        %1051 = vmatprep.subr.mxu0 %v383
        %1052 = vmatpush1.msra.mxu0 %v382
        %1053 = vmatprep.subr.mxu0 %v386
        %1054 = vmatpush1.msra.mxu0 %v385
        %1055 = vmatprep.subr.mxu0 %v389
        %1056 = vmatpush1.msra.mxu0 %v388
        %1057 = vmatprep.subr.mxu0 %v392
        %1058 = vmatpush1.msra.mxu0 %v391
        %1059 = vmatprep.subr.mxu0 %v395
        %1060 = vmatpush1.msra.mxu0 %v394
        %1061 = vmatprep.subr.mxu0 %v398
        %1062 = vmatpush1.msra.mxu0 %v397
        %1063 = vmatprep.subr.mxu0 %v401
        %1064 = vmatpush1.msra.mxu0 %v400
        %1065 = vmatprep.subr.mxu0 %v404
        %1066 = vmatpush1.msra.mxu0 %v403
        %1067 = vmatprep.subr.mxu0 %v407
        %1068 = vmatpush1.msra.mxu0 %v406
        %1069 = vmatprep.subr.mxu0 %v410
        %1070 = vmatpush1.msra.mxu0 %v409
        %1071 = vmatprep.subr.mxu0 %v413
        %1072 = vmatpush1.msra.mxu0 %v412
        %1073 = vmatprep.subr.mxu0 %v416
        %1074 = vmatpush1.msra.mxu0 %v415
        %1075 = vmatprep.subr.mxu0 %v419
        %1076 = vmatpush1.msra.mxu0 %v418
        %1077 = vmatprep.subr.mxu0 0.0
        %1078 = vmatpush1.msra.mxu0 0.0
        %1079 = vmatprep.subr.mxu0 0.0
        %1080 = vmatpush1.msra.mxu0 0.0
        %1081 = vmatprep.subr.mxu0 0.0
        %1082 = vmatpush1.msra.mxu0 0.0
        %1083 = vmatprep.subr.mxu0 0.0
        %1084 = vmatpush1.msra.mxu0 0.0
        %1085 = vmatprep.subr.mxu0 0.0
        %1086 = vmatpush1.msra.mxu0 0.0
        %1087 = vmatprep.subr.mxu0 0.0
        %1088 = vmatpush1.msra.mxu0 0.0
        %1089 = vmatprep.subr.mxu0 0.0
        %1090 = vmatpush1.msra.mxu0 0.0
        %1091 = vmatprep.subr.mxu0 0.0
        %1092 = vmatpush1.msra.mxu0 0.0
        %1093 = vmatprep.subr.mxu0 0.0
        %1094 = vmatpush1.msra.mxu0 0.0
        %1095 = vmatprep.subr.mxu0 0.0
        %1096 = vmatpush1.msra.mxu0 0.0
        %1097 = vmatprep.subr.mxu0 0.0
        %1098 = vmatpush1.msra.mxu0 0.0
        %1099 = vmatprep.subr.mxu0 0.0
        %1100 = vmatpush1.msra.mxu0 0.0
        %1101 = vmatprep.subr.mxu0 0.0
        %1102 = vmatpush1.msra.mxu0 0.0
        %1103 = vmatprep.subr.mxu0 0.0
        %1104 = vmatpush1.msra.mxu0 0.0
        %1105 = vmatprep.subr.mxu0 0.0
        %1106 = vmatpush1.msra.mxu0 0.0
        %1107 = vmatprep.subr.mxu0 0.0
        %1108 = vmatpush1.msra.mxu0 0.0
        %1109 = vmatprep.mubr.f32.mxu0 0.0
        %1110 = vmatmul.mubr.f32.gmra.mrb[0].mxu0 %v1044
        %v1111 = vpop.f32.mrb[0].mxu0
        %v1112 = vadd.f32 %v695, %v1111
        %v1113 = vpop.f32.mrb[0].mxu0
        %v1114 = vadd.f32 %v699, %v1113
        %1115 = vdwg.mxu0
        %1116 = vmatprep.subr.mxu0 0.0
        %1117 = vmatpush1.msra.mxu0 %v375
        %1118 = vmatprep.subr.mxu0 0.0
        %1119 = vmatpush1.msra.mxu0 %v378
        %1120 = vmatprep.subr.mxu0 0.0
        %1121 = vmatpush1.msra.mxu0 %v381
        %1122 = vmatprep.subr.mxu0 0.0
        %1123 = vmatpush1.msra.mxu0 %v384
        %1124 = vmatprep.subr.mxu0 0.0
        %1125 = vmatpush1.msra.mxu0 %v387
        %1126 = vmatprep.subr.mxu0 0.0
        %1127 = vmatpush1.msra.mxu0 %v390
        %1128 = vmatprep.subr.mxu0 0.0
        %1129 = vmatpush1.msra.mxu0 %v393
        %1130 = vmatprep.subr.mxu0 0.0
        %1131 = vmatpush1.msra.mxu0 %v396
        %1132 = vmatprep.subr.mxu0 0.0
        %1133 = vmatpush1.msra.mxu0 %v399
        %1134 = vmatprep.subr.mxu0 0.0
        %1135 = vmatpush1.msra.mxu0 %v402
        %1136 = vmatprep.subr.mxu0 0.0
        %1137 = vmatpush1.msra.mxu0 %v405
        %1138 = vmatprep.subr.mxu0 0.0
        %1139 = vmatpush1.msra.mxu0 %v408
        %1140 = vmatprep.subr.mxu0 0.0
        %1141 = vmatpush1.msra.mxu0 %v411
        %1142 = vmatprep.subr.mxu0 0.0
        %1143 = vmatpush1.msra.mxu0 %v414
        %1144 = vmatprep.subr.mxu0 0.0
        %1145 = vmatpush1.msra.mxu0 %v417
        %1146 = vmatprep.subr.mxu0 0.0
        %1147 = vmatpush1.msra.mxu0 %v420
        %1148 = vmatprep.subr.mxu0 0.0
        %1149 = vmatpush1.msra.mxu0 0.0
        %1150 = vmatprep.subr.mxu0 0.0
        %1151 = vmatpush1.msra.mxu0 0.0
        %1152 = vmatprep.subr.mxu0 0.0
        %1153 = vmatpush1.msra.mxu0 0.0
        %1154 = vmatprep.subr.mxu0 0.0
        %1155 = vmatpush1.msra.mxu0 0.0
        %1156 = vmatprep.subr.mxu0 0.0
        %1157 = vmatpush1.msra.mxu0 0.0
        %1158 = vmatprep.subr.mxu0 0.0
        %1159 = vmatpush1.msra.mxu0 0.0
        %1160 = vmatprep.subr.mxu0 0.0
        %1161 = vmatpush1.msra.mxu0 0.0
        %1162 = vmatprep.subr.mxu0 0.0
        %1163 = vmatpush1.msra.mxu0 0.0
        %1164 = vmatprep.subr.mxu0 0.0
        %1165 = vmatpush1.msra.mxu0 0.0
        %1166 = vmatprep.subr.mxu0 0.0
        %1167 = vmatpush1.msra.mxu0 0.0
        %1168 = vmatprep.subr.mxu0 0.0
        %1169 = vmatpush1.msra.mxu0 0.0
        %1170 = vmatprep.subr.mxu0 0.0
        %1171 = vmatpush1.msra.mxu0 0.0
        %1172 = vmatprep.subr.mxu0 0.0
        %1173 = vmatpush1.msra.mxu0 0.0
        %1174 = vmatprep.subr.mxu0 0.0
        %1175 = vmatpush1.msra.mxu0 0.0
        %1176 = vmatprep.subr.mxu0 0.0
        %1177 = vmatpush1.msra.mxu0 0.0
        %1178 = vmatprep.subr.mxu0 0.0
        %1179 = vmatpush1.msra.mxu0 0.0
        %1180 = vmatprep.mubr.f32.mxu0 0.0
        %1181 = vmatmul.mubr.f32.gmra.mrb[0].mxu0 %v1044
        %v1182 = vpop.f32.mrb[0].mxu0
        %v1183 = vadd.f32 %v703, %v1182
        %v1184 = vpop.f32.mrb[0].mxu0
        %1185 = vdwg.mxu0
        %v1186 = vadd.f32 %v552, %v1112
        %v1187 = vxor.u32 %v1186, 2147483648
        %v1188 = vmul.f32 %v1187, 1.442695
        %v1189 = vpow.pop %v1188
        %v1190 = vadd.f32 %v1189, 1.0
        %v1191 = vrcp.pop %v1190
        %v1192 = vmul.f32 1.0, %v1191
        %v1193 = vadd.f32 %v554, %v1114
        %v1194 = vxor.u32 %v1193, 2147483648
        %v1195 = vmul.f32 %v1194, 1.442695
        %v1196 = vpow.pop %v1195
        %v1197 = vadd.f32 %v1196, 1.0
        %v1198 = vrcp.pop %v1197
        %v1199 = vmul.f32 1.0, %v1198
        %v1200 = vmul.f32 %v1192, %v1183
        %v1201 = vadd.f32 %v663, %v1200
        %v1202 = vtanh.pop %v1201
        %v1203 = vsub.f32 1.0, %v1199
        %v1204 = vmul.f32 %v1203, %v1202
        %v1205 = vmul.f32 %v1199, %v1044
        %v1206 = vadd.f32 %v1204, %v1205
        %vm1207 = vcmp.gt.s32.totalorder %v423, 2
        %v1208 = vsel %vm1207, 1, 0
        %1209 = vset.pattern.permute.xlu0 0
        %1210 = vperm.xlu0 %1209, %v1208
        %v1211 = vpop.permute.xlu0 %1210
        %vm1212 = vcmp.eq.s32.totalorder %v1211, 1
        %v1213 = vsel %vm1212, %v1206, %v1044
        %1214 = vmatprep.subr.mxu0 %v374
        %1215 = vmatpush1.msra.mxu0 %v373
        %1216 = vmatprep.subr.mxu0 %v377
        %1217 = vmatpush1.msra.mxu0 %v376
        %1218 = vmatprep.subr.mxu0 %v380
        %1219 = vmatpush1.msra.mxu0 %v379
        %1220 = vmatprep.subr.mxu0 %v383
        %1221 = vmatpush1.msra.mxu0 %v382
        %1222 = vmatprep.subr.mxu0 %v386
        %1223 = vmatpush1.msra.mxu0 %v385
        %1224 = vmatprep.subr.mxu0 %v389
        %1225 = vmatpush1.msra.mxu0 %v388
        %1226 = vmatprep.subr.mxu0 %v392
        %1227 = vmatpush1.msra.mxu0 %v391
        %1228 = vmatprep.subr.mxu0 %v395
        %1229 = vmatpush1.msra.mxu0 %v394
        %1230 = vmatprep.subr.mxu0 %v398
        %1231 = vmatpush1.msra.mxu0 %v397
        %1232 = vmatprep.subr.mxu0 %v401
        %1233 = vmatpush1.msra.mxu0 %v400
        %1234 = vmatprep.subr.mxu0 %v404
        %1235 = vmatpush1.msra.mxu0 %v403
        %1236 = vmatprep.subr.mxu0 %v407
        %1237 = vmatpush1.msra.mxu0 %v406
        %1238 = vmatprep.subr.mxu0 %v410
        %1239 = vmatpush1.msra.mxu0 %v409
        %1240 = vmatprep.subr.mxu0 %v413
        %1241 = vmatpush1.msra.mxu0 %v412
        %1242 = vmatprep.subr.mxu0 %v416
        %1243 = vmatpush1.msra.mxu0 %v415
        %1244 = vmatprep.subr.mxu0 %v419
        %1245 = vmatpush1.msra.mxu0 %v418
        %1246 = vmatprep.subr.mxu0 0.0
        %1247 = vmatpush1.msra.mxu0 0.0
        %1248 = vmatprep.subr.mxu0 0.0
        %1249 = vmatpush1.msra.mxu0 0.0
        %1250 = vmatprep.subr.mxu0 0.0
        %1251 = vmatpush1.msra.mxu0 0.0
        %1252 = vmatprep.subr.mxu0 0.0
        %1253 = vmatpush1.msra.mxu0 0.0
        %1254 = vmatprep.subr.mxu0 0.0
        %1255 = vmatpush1.msra.mxu0 0.0
        %1256 = vmatprep.subr.mxu0 0.0
        %1257 = vmatpush1.msra.mxu0 0.0
        %1258 = vmatprep.subr.mxu0 0.0
        %1259 = vmatpush1.msra.mxu0 0.0
        %1260 = vmatprep.subr.mxu0 0.0
        %1261 = vmatpush1.msra.mxu0 0.0
        %1262 = vmatprep.subr.mxu0 0.0
        %1263 = vmatpush1.msra.mxu0 0.0
        %1264 = vmatprep.subr.mxu0 0.0
        %1265 = vmatpush1.msra.mxu0 0.0
        %1266 = vmatprep.subr.mxu0 0.0
        %1267 = vmatpush1.msra.mxu0 0.0
        %1268 = vmatprep.subr.mxu0 0.0
        %1269 = vmatpush1.msra.mxu0 0.0
        %1270 = vmatprep.subr.mxu0 0.0
        %1271 = vmatpush1.msra.mxu0 0.0
        %1272 = vmatprep.subr.mxu0 0.0
        %1273 = vmatpush1.msra.mxu0 0.0
        %1274 = vmatprep.subr.mxu0 0.0
        %1275 = vmatpush1.msra.mxu0 0.0
        %1276 = vmatprep.subr.mxu0 0.0
        %1277 = vmatpush1.msra.mxu0 0.0
        %1278 = vmatprep.mubr.f32.mxu0 0.0
        %1279 = vmatmul.mubr.f32.gmra.mrb[0].mxu0 %v1213
        %v1280 = vpop.f32.mrb[0].mxu0
        %v1281 = vadd.f32 %v695, %v1280
        %v1282 = vpop.f32.mrb[0].mxu0
        %v1283 = vadd.f32 %v699, %v1282
        %1284 = vdwg.mxu0
        %1285 = vmatprep.subr.mxu0 0.0
        %1286 = vmatpush1.msra.mxu0 %v375
        %1287 = vmatprep.subr.mxu0 0.0
        %1288 = vmatpush1.msra.mxu0 %v378
        %1289 = vmatprep.subr.mxu0 0.0
        %1290 = vmatpush1.msra.mxu0 %v381
        %1291 = vmatprep.subr.mxu0 0.0
        %1292 = vmatpush1.msra.mxu0 %v384
        %1293 = vmatprep.subr.mxu0 0.0
        %1294 = vmatpush1.msra.mxu0 %v387
        %1295 = vmatprep.subr.mxu0 0.0
        %1296 = vmatpush1.msra.mxu0 %v390
        %1297 = vmatprep.subr.mxu0 0.0
        %1298 = vmatpush1.msra.mxu0 %v393
        %1299 = vmatprep.subr.mxu0 0.0
        %1300 = vmatpush1.msra.mxu0 %v396
        %1301 = vmatprep.subr.mxu0 0.0
        %1302 = vmatpush1.msra.mxu0 %v399
        %1303 = vmatprep.subr.mxu0 0.0
        %1304 = vmatpush1.msra.mxu0 %v402
        %1305 = vmatprep.subr.mxu0 0.0
        %1306 = vmatpush1.msra.mxu0 %v405
        %1307 = vmatprep.subr.mxu0 0.0
        %1308 = vmatpush1.msra.mxu0 %v408
        %1309 = vmatprep.subr.mxu0 0.0
        %1310 = vmatpush1.msra.mxu0 %v411
        %1311 = vmatprep.subr.mxu0 0.0
        %1312 = vmatpush1.msra.mxu0 %v414
        %1313 = vmatprep.subr.mxu0 0.0
        %1314 = vmatpush1.msra.mxu0 %v417
        %1315 = vmatprep.subr.mxu0 0.0
        %1316 = vmatpush1.msra.mxu0 %v420
        %1317 = vmatprep.subr.mxu0 0.0
        %1318 = vmatpush1.msra.mxu0 0.0
        %1319 = vmatprep.subr.mxu0 0.0
        %1320 = vmatpush1.msra.mxu0 0.0
        %1321 = vmatprep.subr.mxu0 0.0
        %1322 = vmatpush1.msra.mxu0 0.0
        %1323 = vmatprep.subr.mxu0 0.0
        %1324 = vmatpush1.msra.mxu0 0.0
        %1325 = vmatprep.subr.mxu0 0.0
        %1326 = vmatpush1.msra.mxu0 0.0
        %1327 = vmatprep.subr.mxu0 0.0
        %1328 = vmatpush1.msra.mxu0 0.0
        %1329 = vmatprep.subr.mxu0 0.0
        %1330 = vmatpush1.msra.mxu0 0.0
        %1331 = vmatprep.subr.mxu0 0.0
        %1332 = vmatpush1.msra.mxu0 0.0
        %1333 = vmatprep.subr.mxu0 0.0
        %1334 = vmatpush1.msra.mxu0 0.0
        %1335 = vmatprep.subr.mxu0 0.0
        %1336 = vmatpush1.msra.mxu0 0.0
        %1337 = vmatprep.subr.mxu0 0.0
        %1338 = vmatpush1.msra.mxu0 0.0
        %1339 = vmatprep.subr.mxu0 0.0
        %1340 = vmatpush1.msra.mxu0 0.0
        %1341 = vmatprep.subr.mxu0 0.0
        %1342 = vmatpush1.msra.mxu0 0.0
        %1343 = vmatprep.subr.mxu0 0.0
        %1344 = vmatpush1.msra.mxu0 0.0
        %1345 = vmatprep.subr.mxu0 0.0
        %1346 = vmatpush1.msra.mxu0 0.0
        %1347 = vmatprep.subr.mxu0 0.0
        %1348 = vmatpush1.msra.mxu0 0.0
        %1349 = vmatprep.mubr.f32.mxu0 0.0
        %1350 = vmatmul.mubr.f32.gmra.mrb[0].mxu0 %v1213
        %v1351 = vpop.f32.mrb[0].mxu0
        %v1352 = vadd.f32 %v703, %v1351
        %v1353 = vpop.f32.mrb[0].mxu0
        %1354 = vdwg.mxu0
        %v1355 = vadd.f32 %v558, %v1281
        %v1356 = vxor.u32 %v1355, 2147483648
        %v1357 = vmul.f32 %v1356, 1.442695
        %v1358 = vpow.pop %v1357
        %v1359 = vadd.f32 %v1358, 1.0
        %v1360 = vrcp.pop %v1359
        %v1361 = vmul.f32 1.0, %v1360
        %v1362 = vadd.f32 %v560, %v1283
        %v1363 = vxor.u32 %v1362, 2147483648
        %v1364 = vmul.f32 %v1363, 1.442695
        %v1365 = vpow.pop %v1364
        %v1366 = vadd.f32 %v1365, 1.0
        %v1367 = vrcp.pop %v1366
        %v1368 = vmul.f32 1.0, %v1367
        %v1369 = vmul.f32 %v1361, %v1352
        %v1370 = vadd.f32 %v668, %v1369
        %v1371 = vtanh.pop %v1370
        %v1372 = vsub.f32 1.0, %v1368
        %v1373 = vmul.f32 %v1372, %v1371
        %v1374 = vmul.f32 %v1368, %v1213
        %v1375 = vadd.f32 %v1373, %v1374
        %vm1376 = vcmp.gt.s32.totalorder %v423, 3
        %v1377 = vsel %vm1376, 1, 0
        %1378 = vset.pattern.permute.xlu0 0
        %1379 = vperm.xlu0 %1378, %v1377
        %v1380 = vpop.permute.xlu0 %1379
        %vm1381 = vcmp.eq.s32.totalorder %v1380, 1
        %v1382 = vsel %vm1381, %v1375, %v1213
        %1383 = vmatprep.subr.mxu0 %v374
        %1384 = vmatpush1.msra.mxu0 %v373
        %1385 = vmatprep.subr.mxu0 %v377
        %1386 = vmatpush1.msra.mxu0 %v376
        %1387 = vmatprep.subr.mxu0 %v380
        %1388 = vmatpush1.msra.mxu0 %v379
        %1389 = vmatprep.subr.mxu0 %v383
        %1390 = vmatpush1.msra.mxu0 %v382
        %1391 = vmatprep.subr.mxu0 %v386
        %1392 = vmatpush1.msra.mxu0 %v385
        %1393 = vmatprep.subr.mxu0 %v389
        %1394 = vmatpush1.msra.mxu0 %v388
        %1395 = vmatprep.subr.mxu0 %v392
        %1396 = vmatpush1.msra.mxu0 %v391
        %1397 = vmatprep.subr.mxu0 %v395
        %1398 = vmatpush1.msra.mxu0 %v394
        %1399 = vmatprep.subr.mxu0 %v398
        %1400 = vmatpush1.msra.mxu0 %v397
        %1401 = vmatprep.subr.mxu0 %v401
        %1402 = vmatpush1.msra.mxu0 %v400
        %1403 = vmatprep.subr.mxu0 %v404
        %1404 = vmatpush1.msra.mxu0 %v403
        %1405 = vmatprep.subr.mxu0 %v407
        %1406 = vmatpush1.msra.mxu0 %v406
        %1407 = vmatprep.subr.mxu0 %v410
        %1408 = vmatpush1.msra.mxu0 %v409
        %1409 = vmatprep.subr.mxu0 %v413
        %1410 = vmatpush1.msra.mxu0 %v412
        %1411 = vmatprep.subr.mxu0 %v416
        %1412 = vmatpush1.msra.mxu0 %v415
        %1413 = vmatprep.subr.mxu0 %v419
        %1414 = vmatpush1.msra.mxu0 %v418
        %1415 = vmatprep.subr.mxu0 0.0
        %1416 = vmatpush1.msra.mxu0 0.0
        %1417 = vmatprep.subr.mxu0 0.0
        %1418 = vmatpush1.msra.mxu0 0.0
        %1419 = vmatprep.subr.mxu0 0.0
        %1420 = vmatpush1.msra.mxu0 0.0
        %1421 = vmatprep.subr.mxu0 0.0
        %1422 = vmatpush1.msra.mxu0 0.0
        %1423 = vmatprep.subr.mxu0 0.0
        %1424 = vmatpush1.msra.mxu0 0.0
        %1425 = vmatprep.subr.mxu0 0.0
        %1426 = vmatpush1.msra.mxu0 0.0
        %1427 = vmatprep.subr.mxu0 0.0
        %1428 = vmatpush1.msra.mxu0 0.0
        %1429 = vmatprep.subr.mxu0 0.0
        %1430 = vmatpush1.msra.mxu0 0.0
        %1431 = vmatprep.subr.mxu0 0.0
        %1432 = vmatpush1.msra.mxu0 0.0
        %1433 = vmatprep.subr.mxu0 0.0
        %1434 = vmatpush1.msra.mxu0 0.0
        %1435 = vmatprep.subr.mxu0 0.0
        %1436 = vmatpush1.msra.mxu0 0.0
        %1437 = vmatprep.subr.mxu0 0.0
        %1438 = vmatpush1.msra.mxu0 0.0
        %1439 = vmatprep.subr.mxu0 0.0
        %1440 = vmatpush1.msra.mxu0 0.0
        %1441 = vmatprep.subr.mxu0 0.0
        %1442 = vmatpush1.msra.mxu0 0.0
        %1443 = vmatprep.subr.mxu0 0.0
        %1444 = vmatpush1.msra.mxu0 0.0
        %1445 = vmatprep.subr.mxu0 0.0
        %1446 = vmatpush1.msra.mxu0 0.0
        %1447 = vmatprep.mubr.f32.mxu0 0.0
        %1448 = vmatmul.mubr.f32.gmra.mrb[0].mxu0 %v1382
        %v1449 = vpop.f32.mrb[0].mxu0
        %v1450 = vadd.f32 %v695, %v1449
        %v1451 = vpop.f32.mrb[0].mxu0
        %v1452 = vadd.f32 %v699, %v1451
        %1453 = vdwg.mxu0
        %1454 = vmatprep.subr.mxu0 0.0
        %1455 = vmatpush1.msra.mxu0 %v375
        %1456 = vmatprep.subr.mxu0 0.0
        %1457 = vmatpush1.msra.mxu0 %v378
        %1458 = vmatprep.subr.mxu0 0.0
        %1459 = vmatpush1.msra.mxu0 %v381
        %1460 = vmatprep.subr.mxu0 0.0
        %1461 = vmatpush1.msra.mxu0 %v384
        %1462 = vmatprep.subr.mxu0 0.0
        %1463 = vmatpush1.msra.mxu0 %v387
        %1464 = vmatprep.subr.mxu0 0.0
        %1465 = vmatpush1.msra.mxu0 %v390
        %1466 = vmatprep.subr.mxu0 0.0
        %1467 = vmatpush1.msra.mxu0 %v393
        %1468 = vmatprep.subr.mxu0 0.0
        %1469 = vmatpush1.msra.mxu0 %v396
        %1470 = vmatprep.subr.mxu0 0.0
        %1471 = vmatpush1.msra.mxu0 %v399
        %1472 = vmatprep.subr.mxu0 0.0
        %1473 = vmatpush1.msra.mxu0 %v402
        %1474 = vmatprep.subr.mxu0 0.0
        %1475 = vmatpush1.msra.mxu0 %v405
        %1476 = vmatprep.subr.mxu0 0.0
        %1477 = vmatpush1.msra.mxu0 %v408
        %1478 = vmatprep.subr.mxu0 0.0
        %1479 = vmatpush1.msra.mxu0 %v411
        %1480 = vmatprep.subr.mxu0 0.0
        %1481 = vmatpush1.msra.mxu0 %v414
        %1482 = vmatprep.subr.mxu0 0.0
        %1483 = vmatpush1.msra.mxu0 %v417
        %1484 = vmatprep.subr.mxu0 0.0
        %1485 = vmatpush1.msra.mxu0 %v420
        %1486 = vmatprep.subr.mxu0 0.0
        %1487 = vmatpush1.msra.mxu0 0.0
        %1488 = vmatprep.subr.mxu0 0.0
        %1489 = vmatpush1.msra.mxu0 0.0
        %1490 = vmatprep.subr.mxu0 0.0
        %1491 = vmatpush1.msra.mxu0 0.0
        %1492 = vmatprep.subr.mxu0 0.0
        %1493 = vmatpush1.msra.mxu0 0.0
        %1494 = vmatprep.subr.mxu0 0.0
        %1495 = vmatpush1.msra.mxu0 0.0
        %1496 = vmatprep.subr.mxu0 0.0
        %1497 = vmatpush1.msra.mxu0 0.0
        %1498 = vmatprep.subr.mxu0 0.0
        %1499 = vmatpush1.msra.mxu0 0.0
        %1500 = vmatprep.subr.mxu0 0.0
        %1501 = vmatpush1.msra.mxu0 0.0
        %1502 = vmatprep.subr.mxu0 0.0
        %1503 = vmatpush1.msra.mxu0 0.0
        %1504 = vmatprep.subr.mxu0 0.0
        %1505 = vmatpush1.msra.mxu0 0.0
        %1506 = vmatprep.subr.mxu0 0.0
        %1507 = vmatpush1.msra.mxu0 0.0
        %1508 = vmatprep.subr.mxu0 0.0
        %1509 = vmatpush1.msra.mxu0 0.0
        %1510 = vmatprep.subr.mxu0 0.0
        %1511 = vmatpush1.msra.mxu0 0.0
        %1512 = vmatprep.subr.mxu0 0.0
        %1513 = vmatpush1.msra.mxu0 0.0
        %1514 = vmatprep.subr.mxu0 0.0
        %1515 = vmatpush1.msra.mxu0 0.0
        %1516 = vmatprep.subr.mxu0 0.0
        %1517 = vmatpush1.msra.mxu0 0.0
        %1518 = vmatprep.mubr.f32.mxu0 0.0
        %1519 = vmatmul.mubr.f32.gmra.mrb[0].mxu0 %v1382
        %v1520 = vpop.f32.mrb[0].mxu0
        %v1521 = vadd.f32 %v703, %v1520
        %v1522 = vpop.f32.mrb[0].mxu0
        %1523 = vdwg.mxu0
        %v1524 = vadd.f32 %v564, %v1450
        %v1525 = vxor.u32 %v1524, 2147483648
        %v1526 = vmul.f32 %v1525, 1.442695
        %v1527 = vpow.pop %v1526
        %v1528 = vadd.f32 %v1527, 1.0
        %v1529 = vrcp.pop %v1528
        %v1530 = vmul.f32 1.0, %v1529
        %v1531 = vadd.f32 %v566, %v1452
        %v1532 = vxor.u32 %v1531, 2147483648
        %v1533 = vmul.f32 %v1532, 1.442695
        %v1534 = vpow.pop %v1533
        %v1535 = vadd.f32 %v1534, 1.0
        %v1536 = vrcp.pop %v1535
        %v1537 = vmul.f32 1.0, %v1536
        %v1538 = vmul.f32 %v1530, %v1521
        %v1539 = vadd.f32 %v673, %v1538
        %v1540 = vtanh.pop %v1539
        %v1541 = vsub.f32 1.0, %v1537
        %v1542 = vmul.f32 %v1541, %v1540
        %v1543 = vmul.f32 %v1537, %v1382
        %v1544 = vadd.f32 %v1542, %v1543
        %vm1545 = vcmp.gt.s32.totalorder %v423, 4
        %v1546 = vsel %vm1545, 1, 0
        %1547 = vset.pattern.permute.xlu0 0
        %1548 = vperm.xlu0 %1547, %v1546
        %v1549 = vpop.permute.xlu0 %1548
        %vm1550 = vcmp.eq.s32.totalorder %v1549, 1
        %v1551 = vsel %vm1550, %v1544, %v1382
        %1552 = vmatprep.subr.mxu0 %v374
        %1553 = vmatpush1.msra.mxu0 %v373
        %1554 = vmatprep.subr.mxu0 %v377
        %1555 = vmatpush1.msra.mxu0 %v376
        %1556 = vmatprep.subr.mxu0 %v380
        %1557 = vmatpush1.msra.mxu0 %v379
        %1558 = vmatprep.subr.mxu0 %v383
        %1559 = vmatpush1.msra.mxu0 %v382
        %1560 = vmatprep.subr.mxu0 %v386
        %1561 = vmatpush1.msra.mxu0 %v385
        %1562 = vmatprep.subr.mxu0 %v389
        %1563 = vmatpush1.msra.mxu0 %v388
        %1564 = vmatprep.subr.mxu0 %v392
        %1565 = vmatpush1.msra.mxu0 %v391
        %1566 = vmatprep.subr.mxu0 %v395
        %1567 = vmatpush1.msra.mxu0 %v394
        %1568 = vmatprep.subr.mxu0 %v398
        %1569 = vmatpush1.msra.mxu0 %v397
        %1570 = vmatprep.subr.mxu0 %v401
        %1571 = vmatpush1.msra.mxu0 %v400
        %1572 = vmatprep.subr.mxu0 %v404
        %1573 = vmatpush1.msra.mxu0 %v403
        %1574 = vmatprep.subr.mxu0 %v407
        %1575 = vmatpush1.msra.mxu0 %v406
        %1576 = vmatprep.subr.mxu0 %v410
        %1577 = vmatpush1.msra.mxu0 %v409
        %1578 = vmatprep.subr.mxu0 %v413
        %1579 = vmatpush1.msra.mxu0 %v412
        %1580 = vmatprep.subr.mxu0 %v416
        %1581 = vmatpush1.msra.mxu0 %v415
        %1582 = vmatprep.subr.mxu0 %v419
        %1583 = vmatpush1.msra.mxu0 %v418
        %1584 = vmatprep.subr.mxu0 0.0
        %1585 = vmatpush1.msra.mxu0 0.0
        %1586 = vmatprep.subr.mxu0 0.0
        %1587 = vmatpush1.msra.mxu0 0.0
        %1588 = vmatprep.subr.mxu0 0.0
        %1589 = vmatpush1.msra.mxu0 0.0
        %1590 = vmatprep.subr.mxu0 0.0
        %1591 = vmatpush1.msra.mxu0 0.0
        %1592 = vmatprep.subr.mxu0 0.0
        %1593 = vmatpush1.msra.mxu0 0.0
        %1594 = vmatprep.subr.mxu0 0.0
        %1595 = vmatpush1.msra.mxu0 0.0
        %1596 = vmatprep.subr.mxu0 0.0
        %1597 = vmatpush1.msra.mxu0 0.0
        %1598 = vmatprep.subr.mxu0 0.0
        %1599 = vmatpush1.msra.mxu0 0.0
        %1600 = vmatprep.subr.mxu0 0.0
        %1601 = vmatpush1.msra.mxu0 0.0
        %1602 = vmatprep.subr.mxu0 0.0
        %1603 = vmatpush1.msra.mxu0 0.0
        %1604 = vmatprep.subr.mxu0 0.0
        %1605 = vmatpush1.msra.mxu0 0.0
        %1606 = vmatprep.subr.mxu0 0.0
        %1607 = vmatpush1.msra.mxu0 0.0
        %1608 = vmatprep.subr.mxu0 0.0
        %1609 = vmatpush1.msra.mxu0 0.0
        %1610 = vmatprep.subr.mxu0 0.0
        %1611 = vmatpush1.msra.mxu0 0.0
        %1612 = vmatprep.subr.mxu0 0.0
        %1613 = vmatpush1.msra.mxu0 0.0
        %1614 = vmatprep.subr.mxu0 0.0
        %1615 = vmatpush1.msra.mxu0 0.0
        %1616 = vmatprep.mubr.f32.mxu0 0.0
        %1617 = vmatmul.mubr.f32.gmra.mrb[0].mxu0 %v1551
        %v1618 = vpop.f32.mrb[0].mxu0
        %v1619 = vadd.f32 %v695, %v1618
        %v1620 = vpop.f32.mrb[0].mxu0
        %v1621 = vadd.f32 %v699, %v1620
        %1622 = vdwg.mxu0
        %1623 = vmatprep.subr.mxu0 0.0
        %1624 = vmatpush1.msra.mxu0 %v375
        %1625 = vmatprep.subr.mxu0 0.0
        %1626 = vmatpush1.msra.mxu0 %v378
        %1627 = vmatprep.subr.mxu0 0.0
        %1628 = vmatpush1.msra.mxu0 %v381
        %1629 = vmatprep.subr.mxu0 0.0
        %1630 = vmatpush1.msra.mxu0 %v384
        %1631 = vmatprep.subr.mxu0 0.0
        %1632 = vmatpush1.msra.mxu0 %v387
        %1633 = vmatprep.subr.mxu0 0.0
        %1634 = vmatpush1.msra.mxu0 %v390
        %1635 = vmatprep.subr.mxu0 0.0
        %1636 = vmatpush1.msra.mxu0 %v393
        %1637 = vmatprep.subr.mxu0 0.0
        %1638 = vmatpush1.msra.mxu0 %v396
        %1639 = vmatprep.subr.mxu0 0.0
        %1640 = vmatpush1.msra.mxu0 %v399
        %1641 = vmatprep.subr.mxu0 0.0
        %1642 = vmatpush1.msra.mxu0 %v402
        %1643 = vmatprep.subr.mxu0 0.0
        %1644 = vmatpush1.msra.mxu0 %v405
        %1645 = vmatprep.subr.mxu0 0.0
        %1646 = vmatpush1.msra.mxu0 %v408
        %1647 = vmatprep.subr.mxu0 0.0
        %1648 = vmatpush1.msra.mxu0 %v411
        %1649 = vmatprep.subr.mxu0 0.0
        %1650 = vmatpush1.msra.mxu0 %v414
        %1651 = vmatprep.subr.mxu0 0.0
        %1652 = vmatpush1.msra.mxu0 %v417
        %1653 = vmatprep.subr.mxu0 0.0
        %1654 = vmatpush1.msra.mxu0 %v420
        %1655 = vmatprep.subr.mxu0 0.0
        %1656 = vmatpush1.msra.mxu0 0.0
        %1657 = vmatprep.subr.mxu0 0.0
        %1658 = vmatpush1.msra.mxu0 0.0
        %1659 = vmatprep.subr.mxu0 0.0
        %1660 = vmatpush1.msra.mxu0 0.0
        %1661 = vmatprep.subr.mxu0 0.0
        %1662 = vmatpush1.msra.mxu0 0.0
        %1663 = vmatprep.subr.mxu0 0.0
        %1664 = vmatpush1.msra.mxu0 0.0
        %1665 = vmatprep.subr.mxu0 0.0
        %1666 = vmatpush1.msra.mxu0 0.0
        %1667 = vmatprep.subr.mxu0 0.0
        %1668 = vmatpush1.msra.mxu0 0.0
        %1669 = vmatprep.subr.mxu0 0.0
        %1670 = vmatpush1.msra.mxu0 0.0
        %1671 = vmatprep.subr.mxu0 0.0
        %1672 = vmatpush1.msra.mxu0 0.0
        %1673 = vmatprep.subr.mxu0 0.0
        %1674 = vmatpush1.msra.mxu0 0.0
        %1675 = vmatprep.subr.mxu0 0.0
        %1676 = vmatpush1.msra.mxu0 0.0
        %1677 = vmatprep.subr.mxu0 0.0
        %1678 = vmatpush1.msra.mxu0 0.0
        %1679 = vmatprep.subr.mxu0 0.0
        %1680 = vmatpush1.msra.mxu0 0.0
        %1681 = vmatprep.subr.mxu0 0.0
        %1682 = vmatpush1.msra.mxu0 0.0
        %1683 = vmatprep.subr.mxu0 0.0
        %1684 = vmatpush1.msra.mxu0 0.0
        %1685 = vmatprep.subr.mxu0 0.0
        %1686 = vmatpush1.msra.mxu0 0.0
        %1687 = vmatprep.mubr.f32.mxu0 0.0
        %1688 = vmatmul.mubr.f32.gmra.mrb[0].mxu0 %v1551
        %v1689 = vpop.f32.mrb[0].mxu0
        %v1690 = vadd.f32 %v703, %v1689
        %v1691 = vpop.f32.mrb[0].mxu0
        %1692 = vdwg.mxu0
        %v1693 = vadd.f32 %v570, %v1619
        %v1694 = vxor.u32 %v1693, 2147483648
        %v1695 = vmul.f32 %v1694, 1.442695
        %v1696 = vpow.pop %v1695
        %v1697 = vadd.f32 %v1696, 1.0
        %v1698 = vrcp.pop %v1697
        %v1699 = vmul.f32 1.0, %v1698
        %v1700 = vadd.f32 %v572, %v1621
        %v1701 = vxor.u32 %v1700, 2147483648
        %v1702 = vmul.f32 %v1701, 1.442695
        %v1703 = vpow.pop %v1702
        %v1704 = vadd.f32 %v1703, 1.0
        %v1705 = vrcp.pop %v1704
        %v1706 = vmul.f32 1.0, %v1705
        %v1707 = vmul.f32 %v1699, %v1690
        %v1708 = vadd.f32 %v678, %v1707
        %v1709 = vtanh.pop %v1708
        %v1710 = vsub.f32 1.0, %v1706
        %v1711 = vmul.f32 %v1710, %v1709
        %v1712 = vmul.f32 %v1706, %v1551
        %v1713 = vadd.f32 %v1711, %v1712
        %vm1714 = vcmp.gt.s32.totalorder %v423, 5
        %v1715 = vsel %vm1714, 1, 0
        %1716 = vset.pattern.permute.xlu0 0
        %1717 = vperm.xlu0 %1716, %v1715
        %v1718 = vpop.permute.xlu0 %1717
        %vm1719 = vcmp.eq.s32.totalorder %v1718, 1
        %v1720 = vsel %vm1719, %v1713, %v1551
        %1721 = vmatprep.subr.mxu0 %v374
        %1722 = vmatpush1.msra.mxu0 %v373
        %1723 = vmatprep.subr.mxu0 %v377
        %1724 = vmatpush1.msra.mxu0 %v376
        %1725 = vmatprep.subr.mxu0 %v380
        %1726 = vmatpush1.msra.mxu0 %v379
        %1727 = vmatprep.subr.mxu0 %v383
        %1728 = vmatpush1.msra.mxu0 %v382
        %1729 = vmatprep.subr.mxu0 %v386
        %1730 = vmatpush1.msra.mxu0 %v385
        %1731 = vmatprep.subr.mxu0 %v389
        %1732 = vmatpush1.msra.mxu0 %v388
        %1733 = vmatprep.subr.mxu0 %v392
        %1734 = vmatpush1.msra.mxu0 %v391
        %1735 = vmatprep.subr.mxu0 %v395
        %1736 = vmatpush1.msra.mxu0 %v394
        %1737 = vmatprep.subr.mxu0 %v398
        %1738 = vmatpush1.msra.mxu0 %v397
        %1739 = vmatprep.subr.mxu0 %v401
        %1740 = vmatpush1.msra.mxu0 %v400
        %1741 = vmatprep.subr.mxu0 %v404
        %1742 = vmatpush1.msra.mxu0 %v403
        %1743 = vmatprep.subr.mxu0 %v407
        %1744 = vmatpush1.msra.mxu0 %v406
        %1745 = vmatprep.subr.mxu0 %v410
        %1746 = vmatpush1.msra.mxu0 %v409
        %1747 = vmatprep.subr.mxu0 %v413
        %1748 = vmatpush1.msra.mxu0 %v412
        %1749 = vmatprep.subr.mxu0 %v416
        %1750 = vmatpush1.msra.mxu0 %v415
        %1751 = vmatprep.subr.mxu0 %v419
        %1752 = vmatpush1.msra.mxu0 %v418
        %1753 = vmatprep.subr.mxu0 0.0
        %1754 = vmatpush1.msra.mxu0 0.0
        %1755 = vmatprep.subr.mxu0 0.0
        %1756 = vmatpush1.msra.mxu0 0.0
        %1757 = vmatprep.subr.mxu0 0.0
        %1758 = vmatpush1.msra.mxu0 0.0
        %1759 = vmatprep.subr.mxu0 0.0
        %1760 = vmatpush1.msra.mxu0 0.0
        %1761 = vmatprep.subr.mxu0 0.0
        %1762 = vmatpush1.msra.mxu0 0.0
        %1763 = vmatprep.subr.mxu0 0.0
        %1764 = vmatpush1.msra.mxu0 0.0
        %1765 = vmatprep.subr.mxu0 0.0
        %1766 = vmatpush1.msra.mxu0 0.0
        %1767 = vmatprep.subr.mxu0 0.0
        %1768 = vmatpush1.msra.mxu0 0.0
        %1769 = vmatprep.subr.mxu0 0.0
        %1770 = vmatpush1.msra.mxu0 0.0
        %1771 = vmatprep.subr.mxu0 0.0
        %1772 = vmatpush1.msra.mxu0 0.0
        %1773 = vmatprep.subr.mxu0 0.0
        %1774 = vmatpush1.msra.mxu0 0.0
        %1775 = vmatprep.subr.mxu0 0.0
        %1776 = vmatpush1.msra.mxu0 0.0
        %1777 = vmatprep.subr.mxu0 0.0
        %1778 = vmatpush1.msra.mxu0 0.0
        %1779 = vmatprep.subr.mxu0 0.0
        %1780 = vmatpush1.msra.mxu0 0.0
        %1781 = vmatprep.subr.mxu0 0.0
        %1782 = vmatpush1.msra.mxu0 0.0
        %1783 = vmatprep.subr.mxu0 0.0
        %1784 = vmatpush1.msra.mxu0 0.0
        %1785 = vmatprep.mubr.f32.mxu0 0.0
        %1786 = vmatmul.mubr.f32.gmra.mrb[0].mxu0 %v1720
        %v1787 = vpop.f32.mrb[0].mxu0
        %v1788 = vadd.f32 %v695, %v1787
        %v1789 = vpop.f32.mrb[0].mxu0
        %v1790 = vadd.f32 %v699, %v1789
        %1791 = vdwg.mxu0
        %1792 = vmatprep.subr.mxu0 0.0
        %1793 = vmatpush1.msra.mxu0 %v375
        %1794 = vmatprep.subr.mxu0 0.0
        %1795 = vmatpush1.msra.mxu0 %v378
        %1796 = vmatprep.subr.mxu0 0.0
        %1797 = vmatpush1.msra.mxu0 %v381
        %1798 = vmatprep.subr.mxu0 0.0
        %1799 = vmatpush1.msra.mxu0 %v384
        %1800 = vmatprep.subr.mxu0 0.0
        %1801 = vmatpush1.msra.mxu0 %v387
        %1802 = vmatprep.subr.mxu0 0.0
        %1803 = vmatpush1.msra.mxu0 %v390
        %1804 = vmatprep.subr.mxu0 0.0
        %1805 = vmatpush1.msra.mxu0 %v393
        %1806 = vmatprep.subr.mxu0 0.0
        %1807 = vmatpush1.msra.mxu0 %v396
        %1808 = vmatprep.subr.mxu0 0.0
        %1809 = vmatpush1.msra.mxu0 %v399
        %1810 = vmatprep.subr.mxu0 0.0
        %1811 = vmatpush1.msra.mxu0 %v402
        %1812 = vmatprep.subr.mxu0 0.0
        %1813 = vmatpush1.msra.mxu0 %v405
        %1814 = vmatprep.subr.mxu0 0.0
        %1815 = vmatpush1.msra.mxu0 %v408
        %1816 = vmatprep.subr.mxu0 0.0
        %1817 = vmatpush1.msra.mxu0 %v411
        %1818 = vmatprep.subr.mxu0 0.0
        %1819 = vmatpush1.msra.mxu0 %v414
        %1820 = vmatprep.subr.mxu0 0.0
        %1821 = vmatpush1.msra.mxu0 %v417
        %1822 = vmatprep.subr.mxu0 0.0
        %1823 = vmatpush1.msra.mxu0 %v420
        %1824 = vmatprep.subr.mxu0 0.0
        %1825 = vmatpush1.msra.mxu0 0.0
        %1826 = vmatprep.subr.mxu0 0.0
        %1827 = vmatpush1.msra.mxu0 0.0
        %1828 = vmatprep.subr.mxu0 0.0
        %1829 = vmatpush1.msra.mxu0 0.0
        %1830 = vmatprep.subr.mxu0 0.0
        %1831 = vmatpush1.msra.mxu0 0.0
        %1832 = vmatprep.subr.mxu0 0.0
        %1833 = vmatpush1.msra.mxu0 0.0
        %1834 = vmatprep.subr.mxu0 0.0
        %1835 = vmatpush1.msra.mxu0 0.0
        %1836 = vmatprep.subr.mxu0 0.0
        %1837 = vmatpush1.msra.mxu0 0.0
        %1838 = vmatprep.subr.mxu0 0.0
        %1839 = vmatpush1.msra.mxu0 0.0
        %1840 = vmatprep.subr.mxu0 0.0
        %1841 = vmatpush1.msra.mxu0 0.0
        %1842 = vmatprep.subr.mxu0 0.0
        %1843 = vmatpush1.msra.mxu0 0.0
        %1844 = vmatprep.subr.mxu0 0.0
        %1845 = vmatpush1.msra.mxu0 0.0
        %1846 = vmatprep.subr.mxu0 0.0
        %1847 = vmatpush1.msra.mxu0 0.0
        %1848 = vmatprep.subr.mxu0 0.0
        %1849 = vmatpush1.msra.mxu0 0.0
        %1850 = vmatprep.subr.mxu0 0.0
        %1851 = vmatpush1.msra.mxu0 0.0
        %1852 = vmatprep.subr.mxu0 0.0
        %1853 = vmatpush1.msra.mxu0 0.0
        %1854 = vmatprep.subr.mxu0 0.0
        %1855 = vmatpush1.msra.mxu0 0.0
        %1856 = vmatprep.mubr.f32.mxu0 0.0
        %1857 = vmatmul.mubr.f32.gmra.mrb[0].mxu0 %v1720
        %v1858 = vpop.f32.mrb[0].mxu0
        %v1859 = vadd.f32 %v703, %v1858
        %v1860 = vpop.f32.mrb[0].mxu0
        %1861 = vdwg.mxu0
        %v1862 = vadd.f32 %v576, %v1788
        %v1863 = vxor.u32 %v1862, 2147483648
        %v1864 = vmul.f32 %v1863, 1.442695
        %v1865 = vpow.pop %v1864
        %v1866 = vadd.f32 %v1865, 1.0
        %v1867 = vrcp.pop %v1866
        %v1868 = vmul.f32 1.0, %v1867
        %v1869 = vadd.f32 %v578, %v1790
        %v1870 = vxor.u32 %v1869, 2147483648
        %v1871 = vmul.f32 %v1870, 1.442695
        %v1872 = vpow.pop %v1871
        %v1873 = vadd.f32 %v1872, 1.0
        %v1874 = vrcp.pop %v1873
        %v1875 = vmul.f32 1.0, %v1874
        %v1876 = vmul.f32 %v1868, %v1859
        %v1877 = vadd.f32 %v683, %v1876
        %v1878 = vtanh.pop %v1877
        %v1879 = vsub.f32 1.0, %v1875
        %v1880 = vmul.f32 %v1879, %v1878
        %v1881 = vmul.f32 %v1875, %v1720
        %v1882 = vadd.f32 %v1880, %v1881
        %vm1883 = vcmp.gt.s32.totalorder %v423, 6
        %v1884 = vsel %vm1883, 1, 0
        %1885 = vset.pattern.permute.xlu0 0
        %1886 = vperm.xlu0 %1885, %v1884
        %v1887 = vpop.permute.xlu0 %1886
        %vm1888 = vcmp.eq.s32.totalorder %v1887, 1
        %v1889 = vsel %vm1888, %v1882, %v1720
        %1890 = vmatprep.subr.mxu0 %v374
        %1891 = vmatpush1.msra.mxu0 %v373
        %1892 = vmatprep.subr.mxu0 %v377
        %1893 = vmatpush1.msra.mxu0 %v376
        %1894 = vmatprep.subr.mxu0 %v380
        %1895 = vmatpush1.msra.mxu0 %v379
        %1896 = vmatprep.subr.mxu0 %v383
        %1897 = vmatpush1.msra.mxu0 %v382
        %1898 = vmatprep.subr.mxu0 %v386
        %1899 = vmatpush1.msra.mxu0 %v385
        %1900 = vmatprep.subr.mxu0 %v389
        %1901 = vmatpush1.msra.mxu0 %v388
        %1902 = vmatprep.subr.mxu0 %v392
        %1903 = vmatpush1.msra.mxu0 %v391
        %1904 = vmatprep.subr.mxu0 %v395
        %1905 = vmatpush1.msra.mxu0 %v394
        %1906 = vmatprep.subr.mxu0 %v398
        %1907 = vmatpush1.msra.mxu0 %v397
        %1908 = vmatprep.subr.mxu0 %v401
        %1909 = vmatpush1.msra.mxu0 %v400
        %1910 = vmatprep.subr.mxu0 %v404
        %1911 = vmatpush1.msra.mxu0 %v403
        %1912 = vmatprep.subr.mxu0 %v407
        %1913 = vmatpush1.msra.mxu0 %v406
        %1914 = vmatprep.subr.mxu0 %v410
        %1915 = vmatpush1.msra.mxu0 %v409
        %1916 = vmatprep.subr.mxu0 %v413
        %1917 = vmatpush1.msra.mxu0 %v412
        %1918 = vmatprep.subr.mxu0 %v416
        %1919 = vmatpush1.msra.mxu0 %v415
        %1920 = vmatprep.subr.mxu0 %v419
        %1921 = vmatpush1.msra.mxu0 %v418
        %1922 = vmatprep.subr.mxu0 0.0
        %1923 = vmatpush1.msra.mxu0 0.0
        %1924 = vmatprep.subr.mxu0 0.0
        %1925 = vmatpush1.msra.mxu0 0.0
        %1926 = vmatprep.subr.mxu0 0.0
        %1927 = vmatpush1.msra.mxu0 0.0
        %1928 = vmatprep.subr.mxu0 0.0
        %1929 = vmatpush1.msra.mxu0 0.0
        %1930 = vmatprep.subr.mxu0 0.0
        %1931 = vmatpush1.msra.mxu0 0.0
        %1932 = vmatprep.subr.mxu0 0.0
        %1933 = vmatpush1.msra.mxu0 0.0
        %1934 = vmatprep.subr.mxu0 0.0
        %1935 = vmatpush1.msra.mxu0 0.0
        %1936 = vmatprep.subr.mxu0 0.0
        %1937 = vmatpush1.msra.mxu0 0.0
        %1938 = vmatprep.subr.mxu0 0.0
        %1939 = vmatpush1.msra.mxu0 0.0
        %1940 = vmatprep.subr.mxu0 0.0
        %1941 = vmatpush1.msra.mxu0 0.0
        %1942 = vmatprep.subr.mxu0 0.0
        %1943 = vmatpush1.msra.mxu0 0.0
        %1944 = vmatprep.subr.mxu0 0.0
        %1945 = vmatpush1.msra.mxu0 0.0
        %1946 = vmatprep.subr.mxu0 0.0
        %1947 = vmatpush1.msra.mxu0 0.0
        %1948 = vmatprep.subr.mxu0 0.0
        %1949 = vmatpush1.msra.mxu0 0.0
        %1950 = vmatprep.subr.mxu0 0.0
        %1951 = vmatpush1.msra.mxu0 0.0
        %1952 = vmatprep.subr.mxu0 0.0
        %1953 = vmatpush1.msra.mxu0 0.0
        %1954 = vmatprep.mubr.f32.mxu0 0.0
        %1955 = vmatmul.mubr.f32.gmra.mrb[0].mxu0 %v1889
        %v1956 = vpop.f32.mrb[0].mxu0
        %v1957 = vadd.f32 %v695, %v1956
        %v1958 = vpop.f32.mrb[0].mxu0
        %v1959 = vadd.f32 %v699, %v1958
        %1960 = vdwg.mxu0
        %1961 = vmatprep.subr.mxu0 0.0
        %1962 = vmatpush1.msra.mxu0 %v375
        %1963 = vmatprep.subr.mxu0 0.0
        %1964 = vmatpush1.msra.mxu0 %v378
        %1965 = vmatprep.subr.mxu0 0.0
        %1966 = vmatpush1.msra.mxu0 %v381
        %1967 = vmatprep.subr.mxu0 0.0
        %1968 = vmatpush1.msra.mxu0 %v384
        %1969 = vmatprep.subr.mxu0 0.0
        %1970 = vmatpush1.msra.mxu0 %v387
        %1971 = vmatprep.subr.mxu0 0.0
        %1972 = vmatpush1.msra.mxu0 %v390
        %1973 = vmatprep.subr.mxu0 0.0
        %1974 = vmatpush1.msra.mxu0 %v393
        %1975 = vmatprep.subr.mxu0 0.0
        %1976 = vmatpush1.msra.mxu0 %v396
        %1977 = vmatprep.subr.mxu0 0.0
        %1978 = vmatpush1.msra.mxu0 %v399
        %1979 = vmatprep.subr.mxu0 0.0
        %1980 = vmatpush1.msra.mxu0 %v402
        %1981 = vmatprep.subr.mxu0 0.0
        %1982 = vmatpush1.msra.mxu0 %v405
        %1983 = vmatprep.subr.mxu0 0.0
        %1984 = vmatpush1.msra.mxu0 %v408
        %1985 = vmatprep.subr.mxu0 0.0
        %1986 = vmatpush1.msra.mxu0 %v411
        %1987 = vmatprep.subr.mxu0 0.0
        %1988 = vmatpush1.msra.mxu0 %v414
        %1989 = vmatprep.subr.mxu0 0.0
        %1990 = vmatpush1.msra.mxu0 %v417
        %1991 = vmatprep.subr.mxu0 0.0
        %1992 = vmatpush1.msra.mxu0 %v420
        %1993 = vmatprep.subr.mxu0 0.0
        %1994 = vmatpush1.msra.mxu0 0.0
        %1995 = vmatprep.subr.mxu0 0.0
        %1996 = vmatpush1.msra.mxu0 0.0
        %1997 = vmatprep.subr.mxu0 0.0
        %1998 = vmatpush1.msra.mxu0 0.0
        %1999 = vmatprep.subr.mxu0 0.0
        %2000 = vmatpush1.msra.mxu0 0.0
        %2001 = vmatprep.subr.mxu0 0.0
        %2002 = vmatpush1.msra.mxu0 0.0
        %2003 = vmatprep.subr.mxu0 0.0
        %2004 = vmatpush1.msra.mxu0 0.0
        %2005 = vmatprep.subr.mxu0 0.0
        %2006 = vmatpush1.msra.mxu0 0.0
        %2007 = vmatprep.subr.mxu0 0.0
        %2008 = vmatpush1.msra.mxu0 0.0
        %2009 = vmatprep.subr.mxu0 0.0
        %2010 = vmatpush1.msra.mxu0 0.0
        %2011 = vmatprep.subr.mxu0 0.0
        %2012 = vmatpush1.msra.mxu0 0.0
        %2013 = vmatprep.subr.mxu0 0.0
        %2014 = vmatpush1.msra.mxu0 0.0
        %2015 = vmatprep.subr.mxu0 0.0
        %2016 = vmatpush1.msra.mxu0 0.0
        %2017 = vmatprep.subr.mxu0 0.0
        %2018 = vmatpush1.msra.mxu0 0.0
        %2019 = vmatprep.subr.mxu0 0.0
        %2020 = vmatpush1.msra.mxu0 0.0
        %2021 = vmatprep.subr.mxu0 0.0
        %2022 = vmatpush1.msra.mxu0 0.0
        %2023 = vmatprep.subr.mxu0 0.0
        %2024 = vmatpush1.msra.mxu0 0.0
        %2025 = vmatprep.mubr.f32.mxu0 0.0
        %2026 = vmatmul.mubr.f32.gmra.mrb[0].mxu0 %v1889
        %v2027 = vpop.f32.mrb[0].mxu0
        %v2028 = vadd.f32 %v703, %v2027
        %v2029 = vpop.f32.mrb[0].mxu0
        %2030 = vdwg.mxu0
        %v2031 = vadd.f32 %v582, %v1957
        %v2032 = vxor.u32 %v2031, 2147483648
        %v2033 = vmul.f32 %v2032, 1.442695
        %v2034 = vpow.pop %v2033
        %v2035 = vadd.f32 %v2034, 1.0
        %v2036 = vrcp.pop %v2035
        %v2037 = vmul.f32 1.0, %v2036
        %v2038 = vadd.f32 %v584, %v1959
        %v2039 = vxor.u32 %v2038, 2147483648
        %v2040 = vmul.f32 %v2039, 1.442695
        %v2041 = vpow.pop %v2040
        %v2042 = vadd.f32 %v2041, 1.0
        %v2043 = vrcp.pop %v2042
        %v2044 = vmul.f32 1.0, %v2043
        %v2045 = vmul.f32 %v2037, %v2028
        %v2046 = vadd.f32 %v688, %v2045
        %v2047 = vtanh.pop %v2046
        %v2048 = vsub.f32 1.0, %v2044
        %v2049 = vmul.f32 %v2048, %v2047
        %v2050 = vmul.f32 %v2044, %v1889
        %v2051 = vadd.f32 %v2049, %v2050
        %vm2052 = vcmp.gt.s32.totalorder %v423, 7
        %v2053 = vsel %vm2052, 1, 0
        %2054 = vset.pattern.permute.xlu0 0
        %2055 = vperm.xlu0 %2054, %v2053
        %v2056 = vpop.permute.xlu0 %2055
        %vm2057 = vcmp.eq.s32.totalorder %v2056, 1
        %v2058 = vsel %vm2057, %v2051, %v1889
        %2059 = vst [vmem:[%s338] sm:$0xff] %v2058
        %s2060 = sand.u32 %s187, 1
        %s2061 = scalar_lea.sflag [#allocation4], %s2060
        %s2062 = sand.u32 %s187, 1
        %s2063 = smul.addr %s2062, 8
        %s2064 = scalar_lea.vmem [#allocation5], %s2063
        // Predicated region
        $region49: #{tpu_custom_call.1} parent=43 // pred_check
          %p2065 = pneg %p197
        $region50: #{tpu_custom_call.1} parent=43 // pred_check_branch
          %2067 = sbr.rel (%p2065) target = $region52
        $region51: #{tpu_custom_call.1} parent=43 // pred_region
          %s2069 = ssub.s32 128, 128
          %2070 = vsyncadd %s2061, %s2069
          %s2071 = smul.addr %s23, 128
          %s2072 = scalar_lea.hbm %s6, %s2071
          %s2074 = sshll.u32 %s2064, 4
          %s2075 = int_to_ptr.vmem [resolvable:$true] %s2074
          %2077 = dma.vmem_to_hbm [thread:$0]  %s2075, 128, %s2072, %s2061
        $region52: #{tpu_custom_call.1} parent=43 // pred_fallthru
          _
      $region44: #{tpu_custom_call.1} parent=5 // pred_fallthru
        _
      %p2078 = scmp.le.s32.totalorder 2, %s18
      // Predicated region
      $region53: #{tpu_custom_call.1} parent=5 // pred_check
        %p2079 = pneg %p2078
      $region54: #{tpu_custom_call.1} parent=5 // pred_check_branch
        %2081 = sbr.rel (%p2079) target = $region56
      $region55: #{tpu_custom_call.1} parent=5 // pred_region
        %s2082 = ssub.s32 %s18, 2
        // Predicated region
        $region57: #{tpu_custom_call.1} parent=55 // pred_check
          %p2083 = pneg %p203
        $region58: #{tpu_custom_call.1} parent=55 // pred_check_branch
          %2085 = sbr.rel (%p2083) target = $region60
        $region59: #{tpu_custom_call.1} parent=55 // pred_region
          %s2086 = sand.u32 %s188, 1
          %s2087 = scalar_lea.sflag [#allocation4], %s2086
          %s2088 = sand.u32 %s188, 1
          %s2089 = smul.addr %s2088, 8
          %s2090 = scalar_lea.vmem [#allocation5], %s2089
          %2091 = dma.done %s2087, 128
        $region60: #{tpu_custom_call.1} parent=55 // pred_fallthru
          _
      $region56: #{tpu_custom_call.1} parent=5 // pred_fallthru
        _
    $region6: #{tpu_custom_call.1} parent=1 // loop_footer
      %s22 = sadd.s32 1, %s18
    $region7: #{tpu_custom_call.1} parent=1 // loop_footer_branch
      %17 = sbr.rel target = $region3
    $region8: #{tpu_custom_call.1} parent=1 // loop_exit
      _
    %2092 = vsyncpa [#allocation3], 1
    %s2093 = scalar_lea.sflag [#allocation3], 1
    %2094 = vsyncpa %s2093, 1
    %2095 = vsyncpa [#allocation4], 1
    %s2096 = scalar_lea.sflag [#allocation4], 1
    %2097 = vsyncpa %s2096, 1

</llo_original>
